<compile_context>
chip_gen: v7x
topology: tpu7x:2x2x1
jax: 0.10.0
libtpu: 0.0.40
codegen_flags: <defaults>
</compile_context>

<pallas_src>
import functools

import jax
import jax.numpy as jnp
from jax import lax
from jax.experimental import pallas as pl
from jax.experimental.pallas import tpu as pltpu

_LANES = 128
_SUBLANES = 8


# ---------------------------------------------------------------------------
# Fused Pallas kernel
# ---------------------------------------------------------------------------
def _lstm_net_kernel(x_ref, w_ih1_ref, w_hh1_ref, b1_ref, w2_ref, b2_ref,
                     w_lin_ref, b_lin_ref, out_ref, g1_scr, h2_scr,
                     *, seq_len, batch):
    """Fused 2-layer LSTM (+tanh) + linear + sigmoid.

    x_ref    : (T*B, I)   bf16  flattened time-major input (B already padded to 8)
    w_ih1_ref: (I, 4H)    bf16  layer-1 input weights (pre-transposed, gates i,f,g,o)
    w_hh1_ref: (H, 4H)    bf16  layer-1 recurrent weights
    b1_ref   : (1, 4H)    f32   b_ih1 + b_hh1
    w2_ref   : (2H, 4H)   bf16  stacked [W_ih2; W_hh2] (fused layer-2 weight)
    b2_ref   : (1, 4H)    f32   b_ih2 + b_hh2
    w_lin_ref: (H, 128)   f32   final linear weight in column 0, rest zero
    b_lin_ref: (1, 1)     f32
    out_ref  : (T*B, 1)   f32   sigmoid(linear(tanh(h2_t)))
    g1_scr   : (T*B, 4H)  f32   precomputed layer-1 input gates (scratch)
    h2_scr   : (T*B, H)   f32   tanh(h2_t) per step (scratch)
    """
    T, B = seq_len, batch
    H = w_hh1_ref.shape[0]
    G = 4 * H

    # --- Hoisted layer-1 input projection + bias: one batched matmul, off the
    #     sequential critical path.
    g1_scr[...] = (
        jnp.dot(x_ref[...], w_ih1_ref[...], preferred_element_type=jnp.float32)
        + b1_ref[...]
    )

    # Hoist weight loads and the layer-2 bias broadcast out of the loop
    # (JAX does not CSE broadcast_in_dim per iteration).
    w_hh1 = w_hh1_ref[...]
    w2 = w2_ref[...]
    b2 = jnp.broadcast_to(b2_ref[...], (B, G))

    def gates_to_state(gates, c_prev):
        # Two full-width transcendental passes instead of four quarter-width:
        # i, f, o come from sigmoid(gates); g from tanh(gates).
        sig = jax.nn.sigmoid(gates)
        tan = jnp.tanh(gates)
        i_g = sig[:, 0 * H:1 * H]
        f_g = sig[:, 1 * H:2 * H]
        o_g = sig[:, 3 * H:4 * H]
        g_g = tan[:, 2 * H:3 * H]
        c_new = f_g * c_prev + i_g * g_g
        h_new = o_g * jnp.tanh(c_new)
        return h_new, c_new

    def step(t, carry):
        h1, c1, h2, c2 = carry
        start = pl.multiple_of(t * B, B)          # B == 8 -> sublane-aligned
        # Layer 1: only the recurrent matmul remains on the per-step chain.
        gates1 = g1_scr[pl.ds(start, B), :] + jnp.dot(
            h1.astype(jnp.bfloat16), w_hh1, preferred_element_type=jnp.float32)
        h1, c1 = gates_to_state(gates1, c1)
        a1 = jnp.tanh(h1)                          # F.tanh on layer-1 *output* only
        # Layer 2: single fused matmul over the concatenated (B, 2H) operand.
        lhs2 = jnp.concatenate([a1, h2], axis=1).astype(jnp.bfloat16)
        gates2 = jnp.dot(lhs2, w2, preferred_element_type=jnp.float32) + b2
        h2, c2 = gates_to_state(gates2, c2)
        h2_scr[pl.ds(start, B), :] = jnp.tanh(h2)  # F.tanh on layer-2 *output* only
        return (h1, c1, h2, c2)

    zero = jnp.zeros((B, H), jnp.float32)
    lax.fori_loop(0, T, step, (zero, zero, zero, zero), unroll=True)

    # --- Final linear (H -> 1) + sigmoid over all timesteps at once, through
    #     the MXU (w_lin lives in column 0 of the padded weight).
    logits = jnp.dot(h2_scr[...], w_lin_ref[...],
                     preferred_element_type=jnp.float32)[:, 0:1] + b_lin_ref[...]
    out_ref[...] = jax.nn.sigmoid(logits)


# ---------------------------------------------------------------------------
# Parameter preparation (run ONCE at init time, outside the jitted forward)
# ---------------------------------------------------------------------------
def prepare_params(params):
    f32, bf16 = jnp.float32, jnp.bfloat16
    H = params["w_hh1"].shape[1]
    w_lin_pad = jnp.zeros((H, _LANES), f32).at[:, 0].set(
        params["w_lin"].reshape(-1).astype(f32))
    return {
        "w_ih1": jnp.transpose(params["w_ih1"]).astype(bf16),        # (I, 4H)
        "w_hh1": jnp.transpose(params["w_hh1"]).astype(bf16),        # (H, 4H)
        "b1": (params["b_ih1"] + params["b_hh1"]).reshape(1, 4 * H).astype(f32),
        "w2": jnp.concatenate(                                       # (2H, 4H)
            [jnp.transpose(params["w_ih2"]), jnp.transpose(params["w_hh2"])],
            axis=0).astype(bf16),
        "b2": (params["b_ih2"] + params["b_hh2"]).reshape(1, 4 * H).astype(f32),
        "w_lin": w_lin_pad,                                          # (H, 128)
        "b_lin": params["b_lin"].reshape(1, 1).astype(f32),          # (1, 1)
    }


# ---------------------------------------------------------------------------
# Wrapper
# ---------------------------------------------------------------------------
_VMEM_SPEC = pl.BlockSpec(memory_space=pltpu.MemorySpace.VMEM)


@jax.jit
def lstm_net_forward(x, prep):
    """x: (T, B, fpLength) float32 -> (T, B) float32."""
    T, B, I = x.shape
    H = prep["w_hh1"].shape[0]
    f32, bf16 = jnp.float32, jnp.bfloat16

    # Pad batch to a full sublane group so every per-step tile is unmasked and
    # every dynamic-slice start is 8-aligned.
    B_pad = max(_SUBLANES, ((B + _SUBLANES - 1) // _SUBLANES) * _SUBLANES)
    x_pad = jnp.pad(x, ((0, 0), (0, B_pad - B), (0, 0)))
    x_flat = x_pad.reshape(T * B_pad, I).astype(bf16)

    kernel = functools.partial(_lstm_net_kernel, seq_len=T, batch=B_pad)
    out_flat = pl.pallas_call(
        kernel,
        out_shape=jax.ShapeDtypeStruct((T * B_pad, 1), f32),
        in_specs=[_VMEM_SPEC] * 8,
        out_specs=_VMEM_SPEC,
        scratch_shapes=[
            pltpu.VMEM((T * B_pad, 4 * H), f32),   # precomputed layer-1 input gates
            pltpu.VMEM((T * B_pad, H), f32),       # tanh(h2_t) sequence
        ],
    )(x_flat, prep["w_ih1"], prep["w_hh1"], prep["b1"], prep["w2"],
      prep["b2"], prep["w_lin"], prep["b_lin"])

    return out_flat.reshape(T, B_pad)[:, :B]


# ---------------------------------------------------------------------------
# Pure-JAX reference (f32, PyTorch-equivalent math) for verification only
# ---------------------------------------------------------------------------
def _lstm_ref(x, w_ih, w_hh, b_ih, b_hh):
    T, B, _ = x.shape
    H = w_hh.shape[1]
    h = jnp.zeros((B, H), jnp.float32)
    c = jnp.zeros((B, H), jnp.float32)
    outs = []
    for t in range(T):
        g = x[t] @ w_ih.T + b_ih + h @ w_hh.T + b_hh
        i = jax.nn.sigmoid(g[:, 0 * H:1 * H])
        f = jax.nn.sigmoid(g[:, 1 * H:2 * H])
        gg = jnp.tanh(g[:, 2 * H:3 * H])
        o = jax.nn.sigmoid(g[:, 3 * H:4 * H])
        c = f * c + i * gg
        h = o * jnp.tanh(c)
        outs.append(h)
    return jnp.stack(outs, axis=0)


def _ref_forward(x, p):
    h1 = jnp.tanh(_lstm_ref(x, p["w_ih1"], p["w_hh1"], p["b_ih1"], p["b_hh1"]))
    h2 = jnp.tanh(_lstm_ref(h1, p["w_ih2"], p["w_hh2"], p["b_ih2"], p["b_hh2"]))
    y = jax.nn.sigmoid(h2 @ p["w_lin"].T + p["b_lin"])
    return y[..., 0]


# ---------------------------------------------------------------------------
# Main
# ---------------------------------------------------------------------------
if __name__ == "__main__":
    SEQ, BATCH = 8, 2
    FP_LENGTH = 16          # input_size (fpLength)
    HIDDEN = 32             # args.hidden

    key = jax.random.PRNGKey(0)
    keys = jax.random.split(key, 12)
    bound = 1.0 / jnp.sqrt(HIDDEN)

    def u(k, shape):
        return jax.random.uniform(k, shape, jnp.float32, -bound, bound)

    params = {
        # layer-1 LSTM (PyTorch layout: weight_* (4H, in), gate order i,f,g,o)
        "w_ih1": u(keys[0], (4 * HIDDEN, FP_LENGTH)),
        "w_hh1": u(keys[1], (4 * HIDDEN, HIDDEN)),
        "b_ih1": u(keys[2], (4 * HIDDEN,)),
        "b_hh1": u(keys[3], (4 * HIDDEN,)),
        # layer-2 LSTM
        "w_ih2": u(keys[4], (4 * HIDDEN, HIDDEN)),
        "w_hh2": u(keys[5], (4 * HIDDEN, HIDDEN)),
        "b_ih2": u(keys[6], (4 * HIDDEN,)),
        "b_hh2": u(keys[7], (4 * HIDDEN,)),
        # final linear (PyTorch layout: (out=1, in=H))
        "w_lin": u(keys[8], (1, HIDDEN)),
        "b_lin": u(keys[9], (1,)),
    }

    x = jax.random.normal(keys[10], (SEQ, BATCH, FP_LENGTH), jnp.float32)

    prep = prepare_params(params)          # one-time weight prep (outside jit)
    out = lstm_net_forward(x, prep)
    out = jax.block_until_ready(out)

    ref = _ref_forward(x, params)
    assert out.shape == (SEQ, BATCH)
    # bf16 MXU operands (f32 accumulation) -> slightly looser tolerance.
    assert jnp.allclose(out, ref, atol=3e-2, rtol=0.0)

    print("KERNEL_OK")
</pallas_src>

<mosaic_0001>
module attributes {stable_mosaic.version = 11 : i64} {
  func.func @_lstm_net_kernel(%arg0: memref<64x16xbf16, #tpu.memory_space<vmem>>, %arg1: memref<16x128xbf16, #tpu.memory_space<vmem>>, %arg2: memref<32x128xbf16, #tpu.memory_space<vmem>>, %arg3: memref<1x128xf32, #tpu.memory_space<vmem>>, %arg4: memref<64x128xbf16, #tpu.memory_space<vmem>>, %arg5: memref<1x128xf32, #tpu.memory_space<vmem>>, %arg6: memref<32x128xf32, #tpu.memory_space<vmem>>, %arg7: memref<1x1xf32, #tpu.memory_space<vmem>>, %arg8: memref<64x1xf32, #tpu.memory_space<vmem>>, %arg9: memref<64x128xf32, #tpu.memory_space<vmem>>, %arg10: memref<64x32xf32, #tpu.memory_space<vmem>>) attributes {dimension_semantics = [], scalar_prefetch = 0 : i64, scratch_operands = 2 : i64, tpu.core_type = #tpu.core_type<tc>} {
    %c0 = arith.constant 0 : index
    %c0_0 = arith.constant 0 : index
    %0 = vector.load %arg0[%c0, %c0_0] : memref<64x16xbf16, #tpu.memory_space<vmem>>, vector<64x16xbf16>
    %c0_1 = arith.constant 0 : index
    %c0_2 = arith.constant 0 : index
    %1 = vector.load %arg1[%c0_1, %c0_2] : memref<16x128xbf16, #tpu.memory_space<vmem>>, vector<16x128xbf16>
    %cst = arith.constant dense<0.000000e+00> : vector<64x128xf32>
    %2 = tpu.matmul %0, %1, %cst {dimension_numbers = #tpu.dot_dimension_numbers<[1], [0], [0], [1], [0, 0, 1, 1], [], []>} : vector<64x16xbf16>, vector<16x128xbf16>, vector<64x128xf32> -> vector<64x128xf32>
    %c0_3 = arith.constant 0 : index
    %c0_4 = arith.constant 0 : index
    %3 = vector.load %arg3[%c0_3, %c0_4] : memref<1x128xf32, #tpu.memory_space<vmem>>, vector<1x128xf32>
    %4 = vector.broadcast %3 : vector<1x128xf32> to vector<64x128xf32>
    %5 = arith.addf %2, %4 : vector<64x128xf32>
    %c0_5 = arith.constant 0 : index
    %c0_6 = arith.constant 0 : index
    %6 = vector.load %arg9[%c0_5, %c0_6] : memref<64x128xf32, #tpu.memory_space<vmem>>, vector<64x128xf32>
    tpu.vector_store %arg9[%c0_5, %c0_6], %5 {strides = array<i32>} : memref<64x128xf32, #tpu.memory_space<vmem>>, vector<64x128xf32>,
    %c0_7 = arith.constant 0 : index
    %c0_8 = arith.constant 0 : index
    %7 = vector.load %arg2[%c0_7, %c0_8] : memref<32x128xbf16, #tpu.memory_space<vmem>>, vector<32x128xbf16>
    %c0_9 = arith.constant 0 : index
    %c0_10 = arith.constant 0 : index
    %8 = vector.load %arg4[%c0_9, %c0_10] : memref<64x128xbf16, #tpu.memory_space<vmem>>, vector<64x128xbf16>
    %c0_11 = arith.constant 0 : index
    %c0_12 = arith.constant 0 : index
    %9 = vector.load %arg5[%c0_11, %c0_12] : memref<1x128xf32, #tpu.memory_space<vmem>>, vector<1x128xf32>
    %10 = vector.shape_cast %9 : vector<1x128xf32> to vector<1x128xf32>
    %11 = vector.broadcast %10 : vector<1x128xf32> to vector<8x128xf32>
    %cst_13 = arith.constant 0.000000e+00 : f32
    %12 = vector.broadcast %cst_13 : f32 to vector<8x32xf32>
    %c0_i32 = arith.constant 0 : i32
    %c8_i32 = arith.constant 8 : i32
    %13 = arith.muli %c0_i32, %c8_i32 : i32
    %14 = tpu.assume_multiple %13, 8 : i32
    %15 = arith.index_cast %14 : i32 to index
    %c0_14 = arith.constant 0 : index
    %16 = vector.load %arg9[%15, %c0_14] : memref<64x128xf32, #tpu.memory_space<vmem>>, vector<8x128xf32>
    %17 = arith.truncf %12 : vector<8x32xf32> to vector<8x32xbf16>
    %cst_15 = arith.constant dense<0.000000e+00> : vector<8x128xf32>
    %18 = tpu.matmul %17, %7, %cst_15 {dimension_numbers = #tpu.dot_dimension_numbers<[1], [0], [0], [1], [0, 0, 1, 1], [], []>} : vector<8x32xbf16>, vector<32x128xbf16>, vector<8x128xf32> -> vector<8x128xf32>
    %19 = arith.addf %16, %18 : vector<8x128xf32>
    %20 = arith.negf %19 : vector<8x128xf32>
    %21 = math.exp %20 : vector<8x128xf32>
    %cst_16 = arith.constant 1.000000e+00 : f32
    %22 = vector.broadcast %cst_16 : f32 to vector<8x128xf32>
    %23 = arith.addf %22, %21 : vector<8x128xf32>
    %24 = arith.divf %22, %23 : vector<8x128xf32>
    %25 = math.tanh %19 : vector<8x128xf32>
    %26 = vector.extract_strided_slice %24 {offsets = [0, 0], sizes = [8, 32], strides = [1, 1]} : vector<8x128xf32> to vector<8x32xf32>
    %27 = vector.extract_strided_slice %24 {offsets = [0, 32], sizes = [8, 32], strides = [1, 1]} : vector<8x128xf32> to vector<8x32xf32>
    %28 = vector.extract_strided_slice %24 {offsets = [0, 96], sizes = [8, 32], strides = [1, 1]} : vector<8x128xf32> to vector<8x32xf32>
    %29 = vector.extract_strided_slice %25 {offsets = [0, 64], sizes = [8, 32], strides = [1, 1]} : vector<8x128xf32> to vector<8x32xf32>
    %30 = arith.mulf %27, %12 : vector<8x32xf32>
    %31 = arith.mulf %26, %29 : vector<8x32xf32>
    %32 = arith.addf %30, %31 : vector<8x32xf32>
    %33 = math.tanh %32 : vector<8x32xf32>
    %34 = arith.mulf %28, %33 : vector<8x32xf32>
    %35 = math.tanh %34 : vector<8x32xf32>
    %36 = tpu.concatenate %35, %12 in 1 : vector<8x32xf32>, vector<8x32xf32> -> vector<8x64xf32>
    %37 = arith.truncf %36 : vector<8x64xf32> to vector<8x64xbf16>
    %cst_17 = arith.constant dense<0.000000e+00> : vector<8x128xf32>
    %38 = tpu.matmul %37, %8, %cst_17 {dimension_numbers = #tpu.dot_dimension_numbers<[1], [0], [0], [1], [0, 0, 1, 1], [], []>} : vector<8x64xbf16>, vector<64x128xbf16>, vector<8x128xf32> -> vector<8x128xf32>
    %39 = arith.addf %38, %11 : vector<8x128xf32>
    %40 = arith.negf %39 : vector<8x128xf32>
    %41 = math.exp %40 : vector<8x128xf32>
    %cst_18 = arith.constant 1.000000e+00 : f32
    %42 = vector.broadcast %cst_18 : f32 to vector<8x128xf32>
    %43 = arith.addf %42, %41 : vector<8x128xf32>
    %44 = arith.divf %42, %43 : vector<8x128xf32>
    %45 = math.tanh %39 : vector<8x128xf32>
    %46 = vector.extract_strided_slice %44 {offsets = [0, 0], sizes = [8, 32], strides = [1, 1]} : vector<8x128xf32> to vector<8x32xf32>
    %47 = vector.extract_strided_slice %44 {offsets = [0, 32], sizes = [8, 32], strides = [1, 1]} : vector<8x128xf32> to vector<8x32xf32>
    %48 = vector.extract_strided_slice %44 {offsets = [0, 96], sizes = [8, 32], strides = [1, 1]} : vector<8x128xf32> to vector<8x32xf32>
    %49 = vector.extract_strided_slice %45 {offsets = [0, 64], sizes = [8, 32], strides = [1, 1]} : vector<8x128xf32> to vector<8x32xf32>
    %50 = arith.mulf %47, %12 : vector<8x32xf32>
    %51 = arith.mulf %46, %49 : vector<8x32xf32>
    %52 = arith.addf %50, %51 : vector<8x32xf32>
    %53 = math.tanh %52 : vector<8x32xf32>
    %54 = arith.mulf %48, %53 : vector<8x32xf32>
    %55 = math.tanh %54 : vector<8x32xf32>
    %56 = arith.index_cast %14 : i32 to index
    %c0_19 = arith.constant 0 : index
    %57 = vector.load %arg10[%56, %c0_19] : memref<64x32xf32, #tpu.memory_space<vmem>>, vector<8x32xf32>
    tpu.vector_store %arg10[%56, %c0_19], %55 {strides = array<i32>} : memref<64x32xf32, #tpu.memory_space<vmem>>, vector<8x32xf32>,
    %c1_i32 = arith.constant 1 : i32
    %c8_i32_20 = arith.constant 8 : i32
    %58 = arith.muli %c1_i32, %c8_i32_20 : i32
    %59 = tpu.assume_multiple %58, 8 : i32
    %60 = arith.index_cast %59 : i32 to index
    %c0_21 = arith.constant 0 : index
    %61 = vector.load %arg9[%60, %c0_21] : memref<64x128xf32, #tpu.memory_space<vmem>>, vector<8x128xf32>
    %62 = arith.truncf %34 : vector<8x32xf32> to vector<8x32xbf16>
    %cst_22 = arith.constant dense<0.000000e+00> : vector<8x128xf32>
    %63 = tpu.matmul %62, %7, %cst_22 {dimension_numbers = #tpu.dot_dimension_numbers<[1], [0], [0], [1], [0, 0, 1, 1], [], []>} : vector<8x32xbf16>, vector<32x128xbf16>, vector<8x128xf32> -> vector<8x128xf32>
    %64 = arith.addf %61, %63 : vector<8x128xf32>
    %65 = arith.negf %64 : vector<8x128xf32>
    %66 = math.exp %65 : vector<8x128xf32>
    %cst_23 = arith.constant 1.000000e+00 : f32
    %67 = vector.broadcast %cst_23 : f32 to vector<8x128xf32>
    %68 = arith.addf %67, %66 : vector<8x128xf32>
    %69 = arith.divf %67, %68 : vector<8x128xf32>
    %70 = math.tanh %64 : vector<8x128xf32>
    %71 = vector.extract_strided_slice %69 {offsets = [0, 0], sizes = [8, 32], strides = [1, 1]} : vector<8x128xf32> to vector<8x32xf32>
    %72 = vector.extract_strided_slice %69 {offsets = [0, 32], sizes = [8, 32], strides = [1, 1]} : vector<8x128xf32> to vector<8x32xf32>
    %73 = vector.extract_strided_slice %69 {offsets = [0, 96], sizes = [8, 32], strides = [1, 1]} : vector<8x128xf32> to vector<8x32xf32>
    %74 = vector.extract_strided_slice %70 {offsets = [0, 64], sizes = [8, 32], strides = [1, 1]} : vector<8x128xf32> to vector<8x32xf32>
    %75 = arith.mulf %72, %32 : vector<8x32xf32>
    %76 = arith.mulf %71, %74 : vector<8x32xf32>
    %77 = arith.addf %75, %76 : vector<8x32xf32>
    %78 = math.tanh %77 : vector<8x32xf32>
    %79 = arith.mulf %73, %78 : vector<8x32xf32>
    %80 = math.tanh %79 : vector<8x32xf32>
    %81 = tpu.concatenate %80, %54 in 1 : vector<8x32xf32>, vector<8x32xf32> -> vector<8x64xf32>
    %82 = arith.truncf %81 : vector<8x64xf32> to vector<8x64xbf16>
    %cst_24 = arith.constant dense<0.000000e+00> : vector<8x128xf32>
    %83 = tpu.matmul %82, %8, %cst_24 {dimension_numbers = #tpu.dot_dimension_numbers<[1], [0], [0], [1], [0, 0, 1, 1], [], []>} : vector<8x64xbf16>, vector<64x128xbf16>, vector<8x128xf32> -> vector<8x128xf32>
    %84 = arith.addf %83, %11 : vector<8x128xf32>
    %85 = arith.negf %84 : vector<8x128xf32>
    %86 = math.exp %85 : vector<8x128xf32>
    %cst_25 = arith.constant 1.000000e+00 : f32
    %87 = vector.broadcast %cst_25 : f32 to vector<8x128xf32>
    %88 = arith.addf %87, %86 : vector<8x128xf32>
    %89 = arith.divf %87, %88 : vector<8x128xf32>
    %90 = math.tanh %84 : vector<8x128xf32>
    %91 = vector.extract_strided_slice %89 {offsets = [0, 0], sizes = [8, 32], strides = [1, 1]} : vector<8x128xf32> to vector<8x32xf32>
    %92 = vector.extract_strided_slice %89 {offsets = [0, 32], sizes = [8, 32], strides = [1, 1]} : vector<8x128xf32> to vector<8x32xf32>
    %93 = vector.extract_strided_slice %89 {offsets = [0, 96], sizes = [8, 32], strides = [1, 1]} : vector<8x128xf32> to vector<8x32xf32>
    %94 = vector.extract_strided_slice %90 {offsets = [0, 64], sizes = [8, 32], strides = [1, 1]} : vector<8x128xf32> to vector<8x32xf32>
    %95 = arith.mulf %92, %52 : vector<8x32xf32>
    %96 = arith.mulf %91, %94 : vector<8x32xf32>
    %97 = arith.addf %95, %96 : vector<8x32xf32>
    %98 = math.tanh %97 : vector<8x32xf32>
    %99 = arith.mulf %93, %98 : vector<8x32xf32>
    %100 = math.tanh %99 : vector<8x32xf32>
    %101 = arith.index_cast %59 : i32 to index
    %c0_26 = arith.constant 0 : index
    %102 = vector.load %arg10[%101, %c0_26] : memref<64x32xf32, #tpu.memory_space<vmem>>, vector<8x32xf32>
    tpu.vector_store %arg10[%101, %c0_26], %100 {strides = array<i32>} : memref<64x32xf32, #tpu.memory_space<vmem>>, vector<8x32xf32>,
    %c2_i32 = arith.constant 2 : i32
    %c8_i32_27 = arith.constant 8 : i32
    %103 = arith.muli %c2_i32, %c8_i32_27 : i32
    %104 = tpu.assume_multiple %103, 8 : i32
    %105 = arith.index_cast %104 : i32 to index
    %c0_28 = arith.constant 0 : index
    %106 = vector.load %arg9[%105, %c0_28] : memref<64x128xf32, #tpu.memory_space<vmem>>, vector<8x128xf32>
    %107 = arith.truncf %79 : vector<8x32xf32> to vector<8x32xbf16>
    %cst_29 = arith.constant dense<0.000000e+00> : vector<8x128xf32>
    %108 = tpu.matmul %107, %7, %cst_29 {dimension_numbers = #tpu.dot_dimension_numbers<[1], [0], [0], [1], [0, 0, 1, 1], [], []>} : vector<8x32xbf16>, vector<32x128xbf16>, vector<8x128xf32> -> vector<8x128xf32>
    %109 = arith.addf %106, %108 : vector<8x128xf32>
    %110 = arith.negf %109 : vector<8x128xf32>
    %111 = math.exp %110 : vector<8x128xf32>
    %cst_30 = arith.constant 1.000000e+00 : f32
    %112 = vector.broadcast %cst_30 : f32 to vector<8x128xf32>
    %113 = arith.addf %112, %111 : vector<8x128xf32>
    %114 = arith.divf %112, %113 : vector<8x128xf32>
    %115 = math.tanh %109 : vector<8x128xf32>
    %116 = vector.extract_strided_slice %114 {offsets = [0, 0], sizes = [8, 32], strides = [1, 1]} : vector<8x128xf32> to vector<8x32xf32>
    %117 = vector.extract_strided_slice %114 {offsets = [0, 32], sizes = [8, 32], strides = [1, 1]} : vector<8x128xf32> to vector<8x32xf32>
    %118 = vector.extract_strided_slice %114 {offsets = [0, 96], sizes = [8, 32], strides = [1, 1]} : vector<8x128xf32> to vector<8x32xf32>
    %119 = vector.extract_strided_slice %115 {offsets = [0, 64], sizes = [8, 32], strides = [1, 1]} : vector<8x128xf32> to vector<8x32xf32>
    %120 = arith.mulf %117, %77 : vector<8x32xf32>
    %121 = arith.mulf %116, %119 : vector<8x32xf32>
    %122 = arith.addf %120, %121 : vector<8x32xf32>
    %123 = math.tanh %122 : vector<8x32xf32>
    %124 = arith.mulf %118, %123 : vector<8x32xf32>
    %125 = math.tanh %124 : vector<8x32xf32>
    %126 = tpu.concatenate %125, %99 in 1 : vector<8x32xf32>, vector<8x32xf32> -> vector<8x64xf32>
    %127 = arith.truncf %126 : vector<8x64xf32> to vector<8x64xbf16>
    %cst_31 = arith.constant dense<0.000000e+00> : vector<8x128xf32>
    %128 = tpu.matmul %127, %8, %cst_31 {dimension_numbers = #tpu.dot_dimension_numbers<[1], [0], [0], [1], [0, 0, 1, 1], [], []>} : vector<8x64xbf16>, vector<64x128xbf16>, vector<8x128xf32> -> vector<8x128xf32>
    %129 = arith.addf %128, %11 : vector<8x128xf32>
    %130 = arith.negf %129 : vector<8x128xf32>
    %131 = math.exp %130 : vector<8x128xf32>
    %cst_32 = arith.constant 1.000000e+00 : f32
    %132 = vector.broadcast %cst_32 : f32 to vector<8x128xf32>
    %133 = arith.addf %132, %131 : vector<8x128xf32>
    %134 = arith.divf %132, %133 : vector<8x128xf32>
    %135 = math.tanh %129 : vector<8x128xf32>
    %136 = vector.extract_strided_slice %134 {offsets = [0, 0], sizes = [8, 32], strides = [1, 1]} : vector<8x128xf32> to vector<8x32xf32>
    %137 = vector.extract_strided_slice %134 {offsets = [0, 32], sizes = [8, 32], strides = [1, 1]} : vector<8x128xf32> to vector<8x32xf32>
    %138 = vector.extract_strided_slice %134 {offsets = [0, 96], sizes = [8, 32], strides = [1, 1]} : vector<8x128xf32> to vector<8x32xf32>
    %139 = vector.extract_strided_slice %135 {offsets = [0, 64], sizes = [8, 32], strides = [1, 1]} : vector<8x128xf32> to vector<8x32xf32>
    %140 = arith.mulf %137, %97 : vector<8x32xf32>
    %141 = arith.mulf %136, %139 : vector<8x32xf32>
    %142 = arith.addf %140, %141 : vector<8x32xf32>
    %143 = math.tanh %142 : vector<8x32xf32>
    %144 = arith.mulf %138, %143 : vector<8x32xf32>
    %145 = math.tanh %144 : vector<8x32xf32>
    %146 = arith.index_cast %104 : i32 to index
    %c0_33 = arith.constant 0 : index
    %147 = vector.load %arg10[%146, %c0_33] : memref<64x32xf32, #tpu.memory_space<vmem>>, vector<8x32xf32>
    tpu.vector_store %arg10[%146, %c0_33], %145 {strides = array<i32>} : memref<64x32xf32, #tpu.memory_space<vmem>>, vector<8x32xf32>,
    %c3_i32 = arith.constant 3 : i32
    %c8_i32_34 = arith.constant 8 : i32
    %148 = arith.muli %c3_i32, %c8_i32_34 : i32
    %149 = tpu.assume_multiple %148, 8 : i32
    %150 = arith.index_cast %149 : i32 to index
    %c0_35 = arith.constant 0 : index
    %151 = vector.load %arg9[%150, %c0_35] : memref<64x128xf32, #tpu.memory_space<vmem>>, vector<8x128xf32>
    %152 = arith.truncf %124 : vector<8x32xf32> to vector<8x32xbf16>
    %cst_36 = arith.constant dense<0.000000e+00> : vector<8x128xf32>
    %153 = tpu.matmul %152, %7, %cst_36 {dimension_numbers = #tpu.dot_dimension_numbers<[1], [0], [0], [1], [0, 0, 1, 1], [], []>} : vector<8x32xbf16>, vector<32x128xbf16>, vector<8x128xf32> -> vector<8x128xf32>
    %154 = arith.addf %151, %153 : vector<8x128xf32>
    %155 = arith.negf %154 : vector<8x128xf32>
    %156 = math.exp %155 : vector<8x128xf32>
    %cst_37 = arith.constant 1.000000e+00 : f32
    %157 = vector.broadcast %cst_37 : f32 to vector<8x128xf32>
    %158 = arith.addf %157, %156 : vector<8x128xf32>
    %159 = arith.divf %157, %158 : vector<8x128xf32>
    %160 = math.tanh %154 : vector<8x128xf32>
    %161 = vector.extract_strided_slice %159 {offsets = [0, 0], sizes = [8, 32], strides = [1, 1]} : vector<8x128xf32> to vector<8x32xf32>
    %162 = vector.extract_strided_slice %159 {offsets = [0, 32], sizes = [8, 32], strides = [1, 1]} : vector<8x128xf32> to vector<8x32xf32>
    %163 = vector.extract_strided_slice %159 {offsets = [0, 96], sizes = [8, 32], strides = [1, 1]} : vector<8x128xf32> to vector<8x32xf32>
    %164 = vector.extract_strided_slice %160 {offsets = [0, 64], sizes = [8, 32], strides = [1, 1]} : vector<8x128xf32> to vector<8x32xf32>
    %165 = arith.mulf %162, %122 : vector<8x32xf32>
    %166 = arith.mulf %161, %164 : vector<8x32xf32>
    %167 = arith.addf %165, %166 : vector<8x32xf32>
    %168 = math.tanh %167 : vector<8x32xf32>
    %169 = arith.mulf %163, %168 : vector<8x32xf32>
    %170 = math.tanh %169 : vector<8x32xf32>
    %171 = tpu.concatenate %170, %144 in 1 : vector<8x32xf32>, vector<8x32xf32> -> vector<8x64xf32>
    %172 = arith.truncf %171 : vector<8x64xf32> to vector<8x64xbf16>
    %cst_38 = arith.constant dense<0.000000e+00> : vector<8x128xf32>
    %173 = tpu.matmul %172, %8, %cst_38 {dimension_numbers = #tpu.dot_dimension_numbers<[1], [0], [0], [1], [0, 0, 1, 1], [], []>} : vector<8x64xbf16>, vector<64x128xbf16>, vector<8x128xf32> -> vector<8x128xf32>
    %174 = arith.addf %173, %11 : vector<8x128xf32>
    %175 = arith.negf %174 : vector<8x128xf32>
    %176 = math.exp %175 : vector<8x128xf32>
    %cst_39 = arith.constant 1.000000e+00 : f32
    %177 = vector.broadcast %cst_39 : f32 to vector<8x128xf32>
    %178 = arith.addf %177, %176 : vector<8x128xf32>
    %179 = arith.divf %177, %178 : vector<8x128xf32>
    %180 = math.tanh %174 : vector<8x128xf32>
    %181 = vector.extract_strided_slice %179 {offsets = [0, 0], sizes = [8, 32], strides = [1, 1]} : vector<8x128xf32> to vector<8x32xf32>
    %182 = vector.extract_strided_slice %179 {offsets = [0, 32], sizes = [8, 32], strides = [1, 1]} : vector<8x128xf32> to vector<8x32xf32>
    %183 = vector.extract_strided_slice %179 {offsets = [0, 96], sizes = [8, 32], strides = [1, 1]} : vector<8x128xf32> to vector<8x32xf32>
    %184 = vector.extract_strided_slice %180 {offsets = [0, 64], sizes = [8, 32], strides = [1, 1]} : vector<8x128xf32> to vector<8x32xf32>
    %185 = arith.mulf %182, %142 : vector<8x32xf32>
    %186 = arith.mulf %181, %184 : vector<8x32xf32>
    %187 = arith.addf %185, %186 : vector<8x32xf32>
    %188 = math.tanh %187 : vector<8x32xf32>
    %189 = arith.mulf %183, %188 : vector<8x32xf32>
    %190 = math.tanh %189 : vector<8x32xf32>
    %191 = arith.index_cast %149 : i32 to index
    %c0_40 = arith.constant 0 : index
    %192 = vector.load %arg10[%191, %c0_40] : memref<64x32xf32, #tpu.memory_space<vmem>>, vector<8x32xf32>
    tpu.vector_store %arg10[%191, %c0_40], %190 {strides = array<i32>} : memref<64x32xf32, #tpu.memory_space<vmem>>, vector<8x32xf32>,
    %c4_i32 = arith.constant 4 : i32
    %c8_i32_41 = arith.constant 8 : i32
    %193 = arith.muli %c4_i32, %c8_i32_41 : i32
    %194 = tpu.assume_multiple %193, 8 : i32
    %195 = arith.index_cast %194 : i32 to index
    %c0_42 = arith.constant 0 : index
    %196 = vector.load %arg9[%195, %c0_42] : memref<64x128xf32, #tpu.memory_space<vmem>>, vector<8x128xf32>
    %197 = arith.truncf %169 : vector<8x32xf32> to vector<8x32xbf16>
    %cst_43 = arith.constant dense<0.000000e+00> : vector<8x128xf32>
    %198 = tpu.matmul %197, %7, %cst_43 {dimension_numbers = #tpu.dot_dimension_numbers<[1], [0], [0], [1], [0, 0, 1, 1], [], []>} : vector<8x32xbf16>, vector<32x128xbf16>, vector<8x128xf32> -> vector<8x128xf32>
    %199 = arith.addf %196, %198 : vector<8x128xf32>
    %200 = arith.negf %199 : vector<8x128xf32>
    %201 = math.exp %200 : vector<8x128xf32>
    %cst_44 = arith.constant 1.000000e+00 : f32
    %202 = vector.broadcast %cst_44 : f32 to vector<8x128xf32>
    %203 = arith.addf %202, %201 : vector<8x128xf32>
    %204 = arith.divf %202, %203 : vector<8x128xf32>
    %205 = math.tanh %199 : vector<8x128xf32>
    %206 = vector.extract_strided_slice %204 {offsets = [0, 0], sizes = [8, 32], strides = [1, 1]} : vector<8x128xf32> to vector<8x32xf32>
    %207 = vector.extract_strided_slice %204 {offsets = [0, 32], sizes = [8, 32], strides = [1, 1]} : vector<8x128xf32> to vector<8x32xf32>
    %208 = vector.extract_strided_slice %204 {offsets = [0, 96], sizes = [8, 32], strides = [1, 1]} : vector<8x128xf32> to vector<8x32xf32>
    %209 = vector.extract_strided_slice %205 {offsets = [0, 64], sizes = [8, 32], strides = [1, 1]} : vector<8x128xf32> to vector<8x32xf32>
    %210 = arith.mulf %207, %167 : vector<8x32xf32>
    %211 = arith.mulf %206, %209 : vector<8x32xf32>
    %212 = arith.addf %210, %211 : vector<8x32xf32>
    %213 = math.tanh %212 : vector<8x32xf32>
    %214 = arith.mulf %208, %213 : vector<8x32xf32>
    %215 = math.tanh %214 : vector<8x32xf32>
    %216 = tpu.concatenate %215, %189 in 1 : vector<8x32xf32>, vector<8x32xf32> -> vector<8x64xf32>
    %217 = arith.truncf %216 : vector<8x64xf32> to vector<8x64xbf16>
    %cst_45 = arith.constant dense<0.000000e+00> : vector<8x128xf32>
    %218 = tpu.matmul %217, %8, %cst_45 {dimension_numbers = #tpu.dot_dimension_numbers<[1], [0], [0], [1], [0, 0, 1, 1], [], []>} : vector<8x64xbf16>, vector<64x128xbf16>, vector<8x128xf32> -> vector<8x128xf32>
    %219 = arith.addf %218, %11 : vector<8x128xf32>
    %220 = arith.negf %219 : vector<8x128xf32>
    %221 = math.exp %220 : vector<8x128xf32>
    %cst_46 = arith.constant 1.000000e+00 : f32
    %222 = vector.broadcast %cst_46 : f32 to vector<8x128xf32>
    %223 = arith.addf %222, %221 : vector<8x128xf32>
    %224 = arith.divf %222, %223 : vector<8x128xf32>
    %225 = math.tanh %219 : vector<8x128xf32>
    %226 = vector.extract_strided_slice %224 {offsets = [0, 0], sizes = [8, 32], strides = [1, 1]} : vector<8x128xf32> to vector<8x32xf32>
    %227 = vector.extract_strided_slice %224 {offsets = [0, 32], sizes = [8, 32], strides = [1, 1]} : vector<8x128xf32> to vector<8x32xf32>
    %228 = vector.extract_strided_slice %224 {offsets = [0, 96], sizes = [8, 32], strides = [1, 1]} : vector<8x128xf32> to vector<8x32xf32>
    %229 = vector.extract_strided_slice %225 {offsets = [0, 64], sizes = [8, 32], strides = [1, 1]} : vector<8x128xf32> to vector<8x32xf32>
    %230 = arith.mulf %227, %187 : vector<8x32xf32>
    %231 = arith.mulf %226, %229 : vector<8x32xf32>
    %232 = arith.addf %230, %231 : vector<8x32xf32>
    %233 = math.tanh %232 : vector<8x32xf32>
    %234 = arith.mulf %228, %233 : vector<8x32xf32>
    %235 = math.tanh %234 : vector<8x32xf32>
    %236 = arith.index_cast %194 : i32 to index
    %c0_47 = arith.constant 0 : index
    %237 = vector.load %arg10[%236, %c0_47] : memref<64x32xf32, #tpu.memory_space<vmem>>, vector<8x32xf32>
    tpu.vector_store %arg10[%236, %c0_47], %235 {strides = array<i32>} : memref<64x32xf32, #tpu.memory_space<vmem>>, vector<8x32xf32>,
    %c5_i32 = arith.constant 5 : i32
    %c8_i32_48 = arith.constant 8 : i32
    %238 = arith.muli %c5_i32, %c8_i32_48 : i32
    %239 = tpu.assume_multiple %238, 8 : i32
    %240 = arith.index_cast %239 : i32 to index
    %c0_49 = arith.constant 0 : index
    %241 = vector.load %arg9[%240, %c0_49] : memref<64x128xf32, #tpu.memory_space<vmem>>, vector<8x128xf32>
    %242 = arith.truncf %214 : vector<8x32xf32> to vector<8x32xbf16>
    %cst_50 = arith.constant dense<0.000000e+00> : vector<8x128xf32>
    %243 = tpu.matmul %242, %7, %cst_50 {dimension_numbers = #tpu.dot_dimension_numbers<[1], [0], [0], [1], [0, 0, 1, 1], [], []>} : vector<8x32xbf16>, vector<32x128xbf16>, vector<8x128xf32> -> vector<8x128xf32>
    %244 = arith.addf %241, %243 : vector<8x128xf32>
    %245 = arith.negf %244 : vector<8x128xf32>
    %246 = math.exp %245 : vector<8x128xf32>
    %cst_51 = arith.constant 1.000000e+00 : f32
    %247 = vector.broadcast %cst_51 : f32 to vector<8x128xf32>
    %248 = arith.addf %247, %246 : vector<8x128xf32>
    %249 = arith.divf %247, %248 : vector<8x128xf32>
    %250 = math.tanh %244 : vector<8x128xf32>
    %251 = vector.extract_strided_slice %249 {offsets = [0, 0], sizes = [8, 32], strides = [1, 1]} : vector<8x128xf32> to vector<8x32xf32>
    %252 = vector.extract_strided_slice %249 {offsets = [0, 32], sizes = [8, 32], strides = [1, 1]} : vector<8x128xf32> to vector<8x32xf32>
    %253 = vector.extract_strided_slice %249 {offsets = [0, 96], sizes = [8, 32], strides = [1, 1]} : vector<8x128xf32> to vector<8x32xf32>
    %254 = vector.extract_strided_slice %250 {offsets = [0, 64], sizes = [8, 32], strides = [1, 1]} : vector<8x128xf32> to vector<8x32xf32>
    %255 = arith.mulf %252, %212 : vector<8x32xf32>
    %256 = arith.mulf %251, %254 : vector<8x32xf32>
    %257 = arith.addf %255, %256 : vector<8x32xf32>
    %258 = math.tanh %257 : vector<8x32xf32>
    %259 = arith.mulf %253, %258 : vector<8x32xf32>
    %260 = math.tanh %259 : vector<8x32xf32>
    %261 = tpu.concatenate %260, %234 in 1 : vector<8x32xf32>, vector<8x32xf32> -> vector<8x64xf32>
    %262 = arith.truncf %261 : vector<8x64xf32> to vector<8x64xbf16>
    %cst_52 = arith.constant dense<0.000000e+00> : vector<8x128xf32>
    %263 = tpu.matmul %262, %8, %cst_52 {dimension_numbers = #tpu.dot_dimension_numbers<[1], [0], [0], [1], [0, 0, 1, 1], [], []>} : vector<8x64xbf16>, vector<64x128xbf16>, vector<8x128xf32> -> vector<8x128xf32>
    %264 = arith.addf %263, %11 : vector<8x128xf32>
    %265 = arith.negf %264 : vector<8x128xf32>
    %266 = math.exp %265 : vector<8x128xf32>
    %cst_53 = arith.constant 1.000000e+00 : f32
    %267 = vector.broadcast %cst_53 : f32 to vector<8x128xf32>
    %268 = arith.addf %267, %266 : vector<8x128xf32>
    %269 = arith.divf %267, %268 : vector<8x128xf32>
    %270 = math.tanh %264 : vector<8x128xf32>
    %271 = vector.extract_strided_slice %269 {offsets = [0, 0], sizes = [8, 32], strides = [1, 1]} : vector<8x128xf32> to vector<8x32xf32>
    %272 = vector.extract_strided_slice %269 {offsets = [0, 32], sizes = [8, 32], strides = [1, 1]} : vector<8x128xf32> to vector<8x32xf32>
    %273 = vector.extract_strided_slice %269 {offsets = [0, 96], sizes = [8, 32], strides = [1, 1]} : vector<8x128xf32> to vector<8x32xf32>
    %274 = vector.extract_strided_slice %270 {offsets = [0, 64], sizes = [8, 32], strides = [1, 1]} : vector<8x128xf32> to vector<8x32xf32>
    %275 = arith.mulf %272, %232 : vector<8x32xf32>
    %276 = arith.mulf %271, %274 : vector<8x32xf32>
    %277 = arith.addf %275, %276 : vector<8x32xf32>
    %278 = math.tanh %277 : vector<8x32xf32>
    %279 = arith.mulf %273, %278 : vector<8x32xf32>
    %280 = math.tanh %279 : vector<8x32xf32>
    %281 = arith.index_cast %239 : i32 to index
    %c0_54 = arith.constant 0 : index
    %282 = vector.load %arg10[%281, %c0_54] : memref<64x32xf32, #tpu.memory_space<vmem>>, vector<8x32xf32>
    tpu.vector_store %arg10[%281, %c0_54], %280 {strides = array<i32>} : memref<64x32xf32, #tpu.memory_space<vmem>>, vector<8x32xf32>,
    %c6_i32 = arith.constant 6 : i32
    %c8_i32_55 = arith.constant 8 : i32
    %283 = arith.muli %c6_i32, %c8_i32_55 : i32
    %284 = tpu.assume_multiple %283, 8 : i32
    %285 = arith.index_cast %284 : i32 to index
    %c0_56 = arith.constant 0 : index
    %286 = vector.load %arg9[%285, %c0_56] : memref<64x128xf32, #tpu.memory_space<vmem>>, vector<8x128xf32>
    %287 = arith.truncf %259 : vector<8x32xf32> to vector<8x32xbf16>
    %cst_57 = arith.constant dense<0.000000e+00> : vector<8x128xf32>
    %288 = tpu.matmul %287, %7, %cst_57 {dimension_numbers = #tpu.dot_dimension_numbers<[1], [0], [0], [1], [0, 0, 1, 1], [], []>} : vector<8x32xbf16>, vector<32x128xbf16>, vector<8x128xf32> -> vector<8x128xf32>
    %289 = arith.addf %286, %288 : vector<8x128xf32>
    %290 = arith.negf %289 : vector<8x128xf32>
    %291 = math.exp %290 : vector<8x128xf32>
    %cst_58 = arith.constant 1.000000e+00 : f32
    %292 = vector.broadcast %cst_58 : f32 to vector<8x128xf32>
    %293 = arith.addf %292, %291 : vector<8x128xf32>
    %294 = arith.divf %292, %293 : vector<8x128xf32>
    %295 = math.tanh %289 : vector<8x128xf32>
    %296 = vector.extract_strided_slice %294 {offsets = [0, 0], sizes = [8, 32], strides = [1, 1]} : vector<8x128xf32> to vector<8x32xf32>
    %297 = vector.extract_strided_slice %294 {offsets = [0, 32], sizes = [8, 32], strides = [1, 1]} : vector<8x128xf32> to vector<8x32xf32>
    %298 = vector.extract_strided_slice %294 {offsets = [0, 96], sizes = [8, 32], strides = [1, 1]} : vector<8x128xf32> to vector<8x32xf32>
    %299 = vector.extract_strided_slice %295 {offsets = [0, 64], sizes = [8, 32], strides = [1, 1]} : vector<8x128xf32> to vector<8x32xf32>
    %300 = arith.mulf %297, %257 : vector<8x32xf32>
    %301 = arith.mulf %296, %299 : vector<8x32xf32>
    %302 = arith.addf %300, %301 : vector<8x32xf32>
    %303 = math.tanh %302 : vector<8x32xf32>
    %304 = arith.mulf %298, %303 : vector<8x32xf32>
    %305 = math.tanh %304 : vector<8x32xf32>
    %306 = tpu.concatenate %305, %279 in 1 : vector<8x32xf32>, vector<8x32xf32> -> vector<8x64xf32>
    %307 = arith.truncf %306 : vector<8x64xf32> to vector<8x64xbf16>
    %cst_59 = arith.constant dense<0.000000e+00> : vector<8x128xf32>
    %308 = tpu.matmul %307, %8, %cst_59 {dimension_numbers = #tpu.dot_dimension_numbers<[1], [0], [0], [1], [0, 0, 1, 1], [], []>} : vector<8x64xbf16>, vector<64x128xbf16>, vector<8x128xf32> -> vector<8x128xf32>
    %309 = arith.addf %308, %11 : vector<8x128xf32>
    %310 = arith.negf %309 : vector<8x128xf32>
    %311 = math.exp %310 : vector<8x128xf32>
    %cst_60 = arith.constant 1.000000e+00 : f32
    %312 = vector.broadcast %cst_60 : f32 to vector<8x128xf32>
    %313 = arith.addf %312, %311 : vector<8x128xf32>
    %314 = arith.divf %312, %313 : vector<8x128xf32>
    %315 = math.tanh %309 : vector<8x128xf32>
    %316 = vector.extract_strided_slice %314 {offsets = [0, 0], sizes = [8, 32], strides = [1, 1]} : vector<8x128xf32> to vector<8x32xf32>
    %317 = vector.extract_strided_slice %314 {offsets = [0, 32], sizes = [8, 32], strides = [1, 1]} : vector<8x128xf32> to vector<8x32xf32>
    %318 = vector.extract_strided_slice %314 {offsets = [0, 96], sizes = [8, 32], strides = [1, 1]} : vector<8x128xf32> to vector<8x32xf32>
    %319 = vector.extract_strided_slice %315 {offsets = [0, 64], sizes = [8, 32], strides = [1, 1]} : vector<8x128xf32> to vector<8x32xf32>
    %320 = arith.mulf %317, %277 : vector<8x32xf32>
    %321 = arith.mulf %316, %319 : vector<8x32xf32>
    %322 = arith.addf %320, %321 : vector<8x32xf32>
    %323 = math.tanh %322 : vector<8x32xf32>
    %324 = arith.mulf %318, %323 : vector<8x32xf32>
    %325 = math.tanh %324 : vector<8x32xf32>
    %326 = arith.index_cast %284 : i32 to index
    %c0_61 = arith.constant 0 : index
    %327 = vector.load %arg10[%326, %c0_61] : memref<64x32xf32, #tpu.memory_space<vmem>>, vector<8x32xf32>
    tpu.vector_store %arg10[%326, %c0_61], %325 {strides = array<i32>} : memref<64x32xf32, #tpu.memory_space<vmem>>, vector<8x32xf32>,
    %c7_i32 = arith.constant 7 : i32
    %c8_i32_62 = arith.constant 8 : i32
    %328 = arith.muli %c7_i32, %c8_i32_62 : i32
    %329 = tpu.assume_multiple %328, 8 : i32
    %330 = arith.index_cast %329 : i32 to index
    %c0_63 = arith.constant 0 : index
    %331 = vector.load %arg9[%330, %c0_63] : memref<64x128xf32, #tpu.memory_space<vmem>>, vector<8x128xf32>
    %332 = arith.truncf %304 : vector<8x32xf32> to vector<8x32xbf16>
    %cst_64 = arith.constant dense<0.000000e+00> : vector<8x128xf32>
    %333 = tpu.matmul %332, %7, %cst_64 {dimension_numbers = #tpu.dot_dimension_numbers<[1], [0], [0], [1], [0, 0, 1, 1], [], []>} : vector<8x32xbf16>, vector<32x128xbf16>, vector<8x128xf32> -> vector<8x128xf32>
    %334 = arith.addf %331, %333 : vector<8x128xf32>
    %335 = arith.negf %334 : vector<8x128xf32>
    %336 = math.exp %335 : vector<8x128xf32>
    %cst_65 = arith.constant 1.000000e+00 : f32
    %337 = vector.broadcast %cst_65 : f32 to vector<8x128xf32>
    %338 = arith.addf %337, %336 : vector<8x128xf32>
    %339 = arith.divf %337, %338 : vector<8x128xf32>
    %340 = math.tanh %334 : vector<8x128xf32>
    %341 = vector.extract_strided_slice %339 {offsets = [0, 0], sizes = [8, 32], strides = [1, 1]} : vector<8x128xf32> to vector<8x32xf32>
    %342 = vector.extract_strided_slice %339 {offsets = [0, 32], sizes = [8, 32], strides = [1, 1]} : vector<8x128xf32> to vector<8x32xf32>
    %343 = vector.extract_strided_slice %339 {offsets = [0, 96], sizes = [8, 32], strides = [1, 1]} : vector<8x128xf32> to vector<8x32xf32>
    %344 = vector.extract_strided_slice %340 {offsets = [0, 64], sizes = [8, 32], strides = [1, 1]} : vector<8x128xf32> to vector<8x32xf32>
    %345 = arith.mulf %342, %302 : vector<8x32xf32>
    %346 = arith.mulf %341, %344 : vector<8x32xf32>
    %347 = arith.addf %345, %346 : vector<8x32xf32>
    %348 = math.tanh %347 : vector<8x32xf32>
    %349 = arith.mulf %343, %348 : vector<8x32xf32>
    %350 = math.tanh %349 : vector<8x32xf32>
    %351 = tpu.concatenate %350, %324 in 1 : vector<8x32xf32>, vector<8x32xf32> -> vector<8x64xf32>
    %352 = arith.truncf %351 : vector<8x64xf32> to vector<8x64xbf16>
    %cst_66 = arith.constant dense<0.000000e+00> : vector<8x128xf32>
    %353 = tpu.matmul %352, %8, %cst_66 {dimension_numbers = #tpu.dot_dimension_numbers<[1], [0], [0], [1], [0, 0, 1, 1], [], []>} : vector<8x64xbf16>, vector<64x128xbf16>, vector<8x128xf32> -> vector<8x128xf32>
    %354 = arith.addf %353, %11 : vector<8x128xf32>
    %355 = arith.negf %354 : vector<8x128xf32>
    %356 = math.exp %355 : vector<8x128xf32>
    %cst_67 = arith.constant 1.000000e+00 : f32
    %357 = vector.broadcast %cst_67 : f32 to vector<8x128xf32>
    %358 = arith.addf %357, %356 : vector<8x128xf32>
    %359 = arith.divf %357, %358 : vector<8x128xf32>
    %360 = math.tanh %354 : vector<8x128xf32>
    %361 = vector.extract_strided_slice %359 {offsets = [0, 0], sizes = [8, 32], strides = [1, 1]} : vector<8x128xf32> to vector<8x32xf32>
    %362 = vector.extract_strided_slice %359 {offsets = [0, 32], sizes = [8, 32], strides = [1, 1]} : vector<8x128xf32> to vector<8x32xf32>
    %363 = vector.extract_strided_slice %359 {offsets = [0, 96], sizes = [8, 32], strides = [1, 1]} : vector<8x128xf32> to vector<8x32xf32>
    %364 = vector.extract_strided_slice %360 {offsets = [0, 64], sizes = [8, 32], strides = [1, 1]} : vector<8x128xf32> to vector<8x32xf32>
    %365 = arith.mulf %362, %322 : vector<8x32xf32>
    %366 = arith.mulf %361, %364 : vector<8x32xf32>
    %367 = arith.addf %365, %366 : vector<8x32xf32>
    %368 = math.tanh %367 : vector<8x32xf32>
    %369 = arith.mulf %363, %368 : vector<8x32xf32>
    %370 = math.tanh %369 : vector<8x32xf32>
    %371 = arith.index_cast %329 : i32 to index
    %c0_68 = arith.constant 0 : index
    %372 = vector.load %arg10[%371, %c0_68] : memref<64x32xf32, #tpu.memory_space<vmem>>, vector<8x32xf32>
    tpu.vector_store %arg10[%371, %c0_68], %370 {strides = array<i32>} : memref<64x32xf32, #tpu.memory_space<vmem>>, vector<8x32xf32>,
    %c8_i32_69 = arith.constant 8 : i32
    %c0_70 = arith.constant 0 : index
    %c0_71 = arith.constant 0 : index
    %373 = vector.load %arg10[%c0_70, %c0_71] : memref<64x32xf32, #tpu.memory_space<vmem>>, vector<64x32xf32>
    %c0_72 = arith.constant 0 : index
    %c0_73 = arith.constant 0 : index
    %374 = vector.load %arg6[%c0_72, %c0_73] : memref<32x128xf32, #tpu.memory_space<vmem>>, vector<32x128xf32>
    %cst_74 = arith.constant dense<0.000000e+00> : vector<64x128xf32>
    %375 = tpu.matmul %373, %374, %cst_74 {dimension_numbers = #tpu.dot_dimension_numbers<[1], [0], [0], [1], [0, 0, 1, 1], [], []>} : vector<64x32xf32>, vector<32x128xf32>, vector<64x128xf32> -> vector<64x128xf32>
    %376 = vector.extract_strided_slice %375 {offsets = [0, 0], sizes = [64, 1], strides = [1, 1]} : vector<64x128xf32> to vector<64x1xf32>
    %c0_75 = arith.constant 0 : index
    %c0_76 = arith.constant 0 : index
    %377 = vector.load %arg7[%c0_75, %c0_76] : memref<1x1xf32, #tpu.memory_space<vmem>>, vector<1x1xf32>
    %378 = vector.broadcast %377 : vector<1x1xf32> to vector<64x1xf32>
    %379 = arith.addf %376, %378 : vector<64x1xf32>
    %380 = arith.negf %379 : vector<64x1xf32>
    %381 = math.exp %380 : vector<64x1xf32>
    %cst_77 = arith.constant 1.000000e+00 : f32
    %382 = vector.broadcast %cst_77 : f32 to vector<64x1xf32>
    %383 = arith.addf %382, %381 : vector<64x1xf32>
    %384 = arith.divf %382, %383 : vector<64x1xf32>
    %c0_78 = arith.constant 0 : index
    %c0_79 = arith.constant 0 : index
    %385 = vector.load %arg8[%c0_78, %c0_79] : memref<64x1xf32, #tpu.memory_space<vmem>>, vector<64x1xf32>
    tpu.vector_store %arg8[%c0_78, %c0_79], %384 {strides = array<i32>} : memref<64x1xf32, #tpu.memory_space<vmem>>, vector<64x1xf32>,
    return
  }
}

</mosaic_0001>

<llo_original>
// kernel: lstm_net_forward.1
$region0: #{lstm_net_forward.1}
  #allocation0 [shape = 'u32[]', space=smem, size = 0x4, offset = 0x4, fixed_abs, tag = 'smem constant byte address 0x4 - core index']
  #allocation1 [shape = 'u32[144,128]{1,0:T(1,128)}', space=vmem, size = 0x12000, scoped, tag = 'internal scratch']
  #allocation2 [shape = 'f32[64,128]{1,0:T(8,128)}', space=vmem, size = 0x8000, scoped, tag = 'scratch operand']
  #allocation3 [shape = 'f32[64,32]{1,0:T(8,128)}', space=vmem, size = 0x8000, scoped, tag = 'scratch operand']
  #allocation4 [shape = 'f32[1,1]{1,0:T(1,128)S(1)}', space=vmem, size = 0x200, scoped, tag = 'scoped memory for lstm_net_forward.1']
  %s0 = inlined_call_operand.vmem [shape: bf16[64,16], index: 0, kind: input, shape index: {}]
  %s1 = inlined_call_operand.hbm [shape: bf16[16,128], index: 1, kind: input, shape index: {}]
  %s2 = inlined_call_operand.vmem [shape: bf16[32,128], index: 2, kind: input, shape index: {}]
  %s3 = inlined_call_operand.vmem [shape: f32[1,128], index: 3, kind: input, shape index: {}]
  %s4 = inlined_call_operand.vmem [shape: bf16[64,128], index: 4, kind: input, shape index: {}]
  %s5 = inlined_call_operand.vmem [shape: f32[1,128], index: 5, kind: input, shape index: {}]
  %s6 = inlined_call_operand.vmem [shape: f32[32,128], index: 6, kind: input, shape index: {}]
  %s7 = inlined_call_operand.<no memory space> [shape: f32[1,1], index: 7, kind: input, shape index: {}]
  %s8 = inlined_call_operand.vmem [shape: f32[64,1], index: 8, kind: output, shape index: {}]
  %s9 = sld [smem:[#allocation0]]
  $region46: #{lstm_net_forward.1} parent=0
    _
  %s11 = ssub.s32 1, %s9
  %s12 = scalar_select 0, %s11, %s9
  %v13 = vstv %s7
  %14 = vst [vmem:[#allocation4] sm:$0x1] %v13
  $region1: #{lstm_net_forward.1} parent=0
    #allocation5 [shape = 'u8[4096]{0}', space=vmem, size = 0x1000, scoped, tag = 'input window, operand 1, single buffered']
    #allocation6 [shape = 's32[1]{0}', space=sflag, size = 0x4, scoped, tag = 'scoped memory for lstm_net_forward.1']
    %15 = vsyncpa [#allocation6], 0
    // Predicated region
    $region2: #{lstm_net_forward.1} parent=1 // pred_check
      _
    $region3: #{lstm_net_forward.1} parent=1 // pred_check_branch
      %17 = sbr.rel (0) target = $region5
    $region4: #{lstm_net_forward.1} parent=1 // pred_region
      _
    $region5: #{lstm_net_forward.1} parent=1 // pred_fallthru
      _
    // Predicated region
    $region6: #{lstm_net_forward.1} parent=1 // pred_check
      _
    $region7: #{lstm_net_forward.1} parent=1 // pred_check_branch
      %19 = sbr.rel (0) target = $region9
    $region8: #{lstm_net_forward.1} parent=1 // pred_region
      %s21 = ssub.s32 128, 128
      %22 = vsyncadd [#allocation6], %s21
      %s23 = sshll.u32 [#allocation5], 4
      %s24 = int_to_ptr.vmem [resolvable:$true] %s23
      %29 = dma.hbm_to_vmem [thread:$0]  %s1, 128, %s24, [#allocation6], 64, 64, 4
    $region9: #{lstm_net_forward.1} parent=1 // pred_fallthru
      _
    // Predicated region
    $region10: #{lstm_net_forward.1} parent=1 // pred_check
      _
    $region11: #{lstm_net_forward.1} parent=1 // pred_check_branch
      %31 = sbr.rel (0) target = $region13
    $region12: #{lstm_net_forward.1} parent=1 // pred_region
      _
    $region13: #{lstm_net_forward.1} parent=1 // pred_fallthru
      _
    // Predicated region
    $region14: #{lstm_net_forward.1} parent=1 // pred_check
      _
    $region15: #{lstm_net_forward.1} parent=1 // pred_check_branch
      %33 = sbr.rel (0) target = $region17
    $region16: #{lstm_net_forward.1} parent=1 // pred_region
      _
    $region17: #{lstm_net_forward.1} parent=1 // pred_fallthru
      _
    // Predicated region
    $region18: #{lstm_net_forward.1} parent=1 // pred_check
      _
    $region19: #{lstm_net_forward.1} parent=1 // pred_check_branch
      %35 = sbr.rel (0) target = $region21
    $region20: #{lstm_net_forward.1} parent=1 // pred_region
      _
    $region21: #{lstm_net_forward.1} parent=1 // pred_fallthru
      _
    // Predicated region
    $region22: #{lstm_net_forward.1} parent=1 // pred_check
      _
    $region23: #{lstm_net_forward.1} parent=1 // pred_check_branch
      %37 = sbr.rel (0) target = $region25
    $region24: #{lstm_net_forward.1} parent=1 // pred_region
      _
    $region25: #{lstm_net_forward.1} parent=1 // pred_fallthru
      _
    // Predicated region
    $region26: #{lstm_net_forward.1} parent=1 // pred_check
      _
    $region27: #{lstm_net_forward.1} parent=1 // pred_check_branch
      %39 = sbr.rel (0) target = $region29
    $region28: #{lstm_net_forward.1} parent=1 // pred_region
      _
    $region29: #{lstm_net_forward.1} parent=1 // pred_fallthru
      _
    // Predicated region
    $region30: #{lstm_net_forward.1} parent=1 // pred_check
      _
    $region31: #{lstm_net_forward.1} parent=1 // pred_check_branch
      %41 = sbr.rel (0) target = $region33
    $region32: #{lstm_net_forward.1} parent=1 // pred_region
      _
    $region33: #{lstm_net_forward.1} parent=1 // pred_fallthru
      _
    // Predicated region
    $region34: #{lstm_net_forward.1} parent=1 // pred_check
      _
    $region35: #{lstm_net_forward.1} parent=1 // pred_check_branch
      %43 = sbr.rel (0) target = $region37
    $region36: #{lstm_net_forward.1} parent=1 // pred_region
      %44 = dma.done [#allocation6], 128
    $region37: #{lstm_net_forward.1} parent=1 // pred_fallthru
      _
    %v46 = vld [vmem:[%s0] sm:$0xf]
    %v47 = vld [vmem:[%s0 + $0x4] sm:$0xf]
    %v48 = vld [vmem:[%s0 + $0x8] sm:$0xf]
    %v49 = vld [vmem:[%s0 + $0xc] sm:$0xf]
    %v50 = vld [vmem:[%s0 + $0x10] sm:$0xf]
    %v51 = vld [vmem:[%s0 + $0x14] sm:$0xf]
    %v52 = vld [vmem:[%s0 + $0x18] sm:$0xf]
    %v53 = vld [vmem:[%s0 + $0x1c] sm:$0xf]
    %v54 = vld [vmem:[#allocation5] sm:$0xf]
    %v55 = vld [vmem:[#allocation5 + $0x4] sm:$0xf]
    %v56 = vld [vmem:[%s3] sm:$0x1]
    %v58 = vlaneseq
    %v59 = vshrl.u32 %v58, 7
    %v60 = vsub.s32 0, %v59
    %v61 = vrot.slane %v56, %v60
    %v71 = vunpack.c.l.b16 %v46
    %v72 = vunpack.c.l.b16 %v47
    %v73 = vunpack.c.l.b16 %v48
    %v74 = vunpack.c.l.b16 %v49
    %v75 = vunpack.c.l.b16 %v50
    %v76 = vunpack.c.l.b16 %v51
    %v77 = vunpack.c.l.b16 %v52
    %v78 = vunpack.c.l.b16 %v53
    %v79 = vpack.c.b16 %v72, %v71
    %v80 = vpack.c.b16 %v74, %v73
    %v81 = vpack.c.b16 %v76, %v75
    %v82 = vpack.c.b16 %v78, %v77
    %v85 = vunpack.c.l.b16 %v54
    %v86 = vunpack.c.l.b16 %v55
    %v87 = vpack.c.b16 %v86, %v85
    %vm89 = vcmask 130048
    %v91 = vsel %vm89, %v79, 0
    %v94 = vsel %vm89, %v80, 0
    %v97 = vsel %vm89, %v81, 0
    %v100 = vsel %vm89, %v82, 0
    %102 = vmatprep.subr.bf16.mxu0 0
    %103 = vmatpush1.bf16.msra.mxu0 %v87
    %104 = vmatprep.subr.bf16.mxu0 0
    %105 = vmatpush1.bf16.msra.mxu0 0
    %106 = vmatprep.subr.bf16.mxu0 0
    %107 = vmatpush1.bf16.msra.mxu0 0
    %108 = vmatprep.subr.bf16.mxu0 0
    %109 = vmatpush1.bf16.msra.mxu0 0
    %110 = vmatprep.subr.bf16.mxu0 0
    %111 = vmatpush1.bf16.msra.mxu0 0
    %112 = vmatprep.subr.bf16.mxu0 0
    %113 = vmatpush1.bf16.msra.mxu0 0
    %114 = vmatprep.subr.bf16.mxu0 0
    %115 = vmatpush1.bf16.msra.mxu0 0
    %116 = vmatprep.subr.bf16.mxu0 0
    %117 = vmatpush1.bf16.msra.mxu0 0
    %118 = vmatprep.subr.bf16.mxu0 0
    %119 = vmatpush1.bf16.msra.mxu0 0
    %120 = vmatprep.subr.bf16.mxu0 0
    %121 = vmatpush1.bf16.msra.mxu0 0
    %122 = vmatprep.subr.bf16.mxu0 0
    %123 = vmatpush1.bf16.msra.mxu0 0
    %124 = vmatprep.subr.bf16.mxu0 0
    %125 = vmatpush1.bf16.msra.mxu0 0
    %126 = vmatprep.subr.bf16.mxu0 0
    %127 = vmatpush1.bf16.msra.mxu0 0
    %128 = vmatprep.subr.bf16.mxu0 0
    %129 = vmatpush1.bf16.msra.mxu0 0
    %130 = vmatprep.subr.bf16.mxu0 0
    %131 = vmatpush1.bf16.msra.mxu0 0
    %132 = vmatprep.subr.bf16.mxu0 0
    %133 = vmatpush1.bf16.msra.mxu0 0
    %134 = vmatprep.mubr.bf16.mxu0 0
    %135 = vmatmul.mubr.bf16.gmra.mrb[0].mxu0 %v91
    %v136 = vpop.f32.mrb[0].mxu0
    %v137 = vadd.f32 %v61, %v136
    %v138 = vpop.f32.mrb[0].mxu0
    %v139 = vpop.f32.mrb[0].mxu0
    %v140 = vadd.f32 %v61, %v139
    %v141 = vpop.f32.mrb[0].mxu0
    %142 = vmatprep.mubr.bf16.mxu0 0
    %143 = vmatmul.mubr.bf16.gmra.mrb[0].mxu0 %v94
    %v144 = vpop.f32.mrb[0].mxu0
    %v145 = vadd.f32 %v61, %v144
    %v146 = vpop.f32.mrb[0].mxu0
    %v147 = vpop.f32.mrb[0].mxu0
    %v148 = vadd.f32 %v61, %v147
    %v149 = vpop.f32.mrb[0].mxu0
    %150 = vmatprep.mubr.bf16.mxu0 0
    %151 = vmatmul.mubr.bf16.gmra.mrb[0].mxu0 %v97
    %v152 = vpop.f32.mrb[0].mxu0
    %v153 = vadd.f32 %v61, %v152
    %v154 = vpop.f32.mrb[0].mxu0
    %v155 = vpop.f32.mrb[0].mxu0
    %v156 = vadd.f32 %v61, %v155
    %v157 = vpop.f32.mrb[0].mxu0
    %158 = vmatprep.mubr.bf16.mxu0 0
    %159 = vmatmul.mubr.bf16.gmra.mrb[0].mxu0 %v100
    %v160 = vpop.f32.mrb[0].mxu0
    %v161 = vadd.f32 %v61, %v160
    %v162 = vpop.f32.mrb[0].mxu0
    %v163 = vpop.f32.mrb[0].mxu0
    %v164 = vadd.f32 %v61, %v163
    %v165 = vpop.f32.mrb[0].mxu0
    %166 = vdwg.mxu0
    %167 = vst [vmem:[#allocation2] sm:$0xff] %v137
    %168 = vst [vmem:[#allocation2 + $0x8] sm:$0xff] %v140
    %169 = vst [vmem:[#allocation2 + $0x10] sm:$0xff] %v145
    %170 = vst [vmem:[#allocation2 + $0x18] sm:$0xff] %v148
    %171 = vst [vmem:[#allocation2 + $0x20] sm:$0xff] %v153
    %172 = vst [vmem:[#allocation2 + $0x28] sm:$0xff] %v156
    %173 = vst [vmem:[#allocation2 + $0x30] sm:$0xff] %v161
    %174 = vst [vmem:[#allocation2 + $0x38] sm:$0xff] %v164
    %v175 = vld [vmem:[%s2] sm:$0xf]
    %v176 = vld [vmem:[%s2 + $0x4] sm:$0xf]
    %v177 = vld [vmem:[%s2 + $0x8] sm:$0xf]
    %v178 = vld [vmem:[%s2 + $0xc] sm:$0xf]
    %v179 = vld [vmem:[%s4] sm:$0xf]
    %v180 = vld [vmem:[%s4 + $0x4] sm:$0xf]
    %v181 = vld [vmem:[%s4 + $0x8] sm:$0xf]
    %v182 = vld [vmem:[%s4 + $0xc] sm:$0xf]
    %v183 = vld [vmem:[%s4 + $0x10] sm:$0xf]
    %v184 = vld [vmem:[%s4 + $0x14] sm:$0xf]
    %v185 = vld [vmem:[%s4 + $0x18] sm:$0xf]
    %v186 = vld [vmem:[%s4 + $0x1c] sm:$0xf]
    %v187 = vld [vmem:[%s5] sm:$0x1]
    %v189 = vlaneseq
    %v190 = vshrl.u32 %v189, 7
    %v191 = vsub.s32 0, %v190
    %v192 = vrot.slane %v187, %v191
    %v194 = vld [vmem:[#allocation2] sm:$0xff]
    %v199 = vunpack.c.l.b16 %v175
    %v200 = vunpack.c.l.b16 %v176
    %v201 = vunpack.c.l.b16 %v177
    %v202 = vunpack.c.l.b16 %v178
    %v203 = vpack.c.b16 %v200, %v199
    %v204 = vpack.c.b16 %v202, %v201
    %vm207 = vcmask 261120
    %v209 = vsel %vm207, 0, 0
    %211 = vmatprep.subr.bf16.mxu0 0
    %212 = vmatpush1.bf16.msra.mxu0 %v203
    %213 = vmatprep.subr.bf16.mxu0 0
    %214 = vmatpush1.bf16.msra.mxu0 %v204
    %215 = vmatprep.subr.bf16.mxu0 0
    %216 = vmatpush1.bf16.msra.mxu0 0
    %217 = vmatprep.subr.bf16.mxu0 0
    %218 = vmatpush1.bf16.msra.mxu0 0
    %219 = vmatprep.subr.bf16.mxu0 0
    %220 = vmatpush1.bf16.msra.mxu0 0
    %221 = vmatprep.subr.bf16.mxu0 0
    %222 = vmatpush1.bf16.msra.mxu0 0
    %223 = vmatprep.subr.bf16.mxu0 0
    %224 = vmatpush1.bf16.msra.mxu0 0
    %225 = vmatprep.subr.bf16.mxu0 0
    %226 = vmatpush1.bf16.msra.mxu0 0
    %227 = vmatprep.subr.bf16.mxu0 0
    %228 = vmatpush1.bf16.msra.mxu0 0
    %229 = vmatprep.subr.bf16.mxu0 0
    %230 = vmatpush1.bf16.msra.mxu0 0
    %231 = vmatprep.subr.bf16.mxu0 0
    %232 = vmatpush1.bf16.msra.mxu0 0
    %233 = vmatprep.subr.bf16.mxu0 0
    %234 = vmatpush1.bf16.msra.mxu0 0
    %235 = vmatprep.subr.bf16.mxu0 0
    %236 = vmatpush1.bf16.msra.mxu0 0
    %237 = vmatprep.subr.bf16.mxu0 0
    %238 = vmatpush1.bf16.msra.mxu0 0
    %239 = vmatprep.subr.bf16.mxu0 0
    %240 = vmatpush1.bf16.msra.mxu0 0
    %241 = vmatprep.subr.bf16.mxu0 0
    %242 = vmatpush1.bf16.msra.mxu0 0
    %243 = vmatprep.mubr.bf16.mxu0 0
    %244 = vmatmul.mubr.bf16.gmra.mrb[0].mxu0 %v209
    %v245 = vpop.f32.mrb[0].mxu0
    %v246 = vadd.f32 0.0, %v245
    %v247 = vpop.f32.mrb[0].mxu0
    %v248 = vpop.f32.mrb[0].mxu0
    %v249 = vpop.f32.mrb[0].mxu0
    %250 = vdwg.mxu0
    %v251 = vadd.f32 %v194, %v246
    %v252 = vxor.u32 %v251, 2147483648
    %v253 = vmul.f32 %v252, 1.442695
    %v254 = vpow.pop %v253
    %v255 = vadd.f32 %v254, 1.0
    %v256 = vrcp.pop %v255
    %v257 = vmul.f32 1.0, %v256
    %v258 = vtanh.pop %v251
    %v259 = vmul.f32 %v257, 0.0
    %261 = vrot.lane.b32.xlu0 %v258, 64
    %v262 = vpop.permute.xlu0 %261
    %v264 = vmul.f32 %v257, %v262
    %266 = vrot.lane.b32.xlu0 %v264, 32
    %v267 = vpop.permute.xlu0 %266
    %v269 = vadd.f32 %v259, %v267
    %v270 = vtanh.pop %v269
    %272 = vrot.lane.b32.xlu0 %v270, 64
    %v273 = vpop.permute.xlu0 %272
    %v275 = vmul.f32 %v257, %v273
    %v276 = vtanh.pop %v275
    %278 = vrot.lane.b32.xlu0 %v276, 32
    %v279 = vpop.permute.xlu0 %278
    %v281 = vsel %vm207, %v279, 0.0
    %v282 = vpack.c.bf16 %v281, %v281
    %v291 = vunpack.c.l.b16 %v179
    %v292 = vunpack.c.l.b16 %v180
    %v293 = vunpack.c.l.b16 %v181
    %v294 = vunpack.c.l.b16 %v182
    %v295 = vunpack.c.l.b16 %v183
    %v296 = vunpack.c.l.b16 %v184
    %v297 = vunpack.c.l.b16 %v185
    %v298 = vunpack.c.l.b16 %v186
    %v299 = vpack.c.b16 %v292, %v291
    %v300 = vpack.c.b16 %v294, %v293
    %v301 = vpack.c.b16 %v296, %v295
    %v302 = vpack.c.b16 %v298, %v297
    %vm307 = vcmask 523264
    %v309 = vsel %vm307, %v282, 0
    %311 = vmatprep.subr.bf16.mxu0 0
    %312 = vmatpush1.bf16.msra.mxu0 %v299
    %313 = vmatprep.subr.bf16.mxu0 0
    %314 = vmatpush1.bf16.msra.mxu0 %v300
    %315 = vmatprep.subr.bf16.mxu0 0
    %316 = vmatpush1.bf16.msra.mxu0 %v301
    %317 = vmatprep.subr.bf16.mxu0 0
    %318 = vmatpush1.bf16.msra.mxu0 %v302
    %319 = vmatprep.subr.bf16.mxu0 0
    %320 = vmatpush1.bf16.msra.mxu0 0
    %321 = vmatprep.subr.bf16.mxu0 0
    %322 = vmatpush1.bf16.msra.mxu0 0
    %323 = vmatprep.subr.bf16.mxu0 0
    %324 = vmatpush1.bf16.msra.mxu0 0
    %325 = vmatprep.subr.bf16.mxu0 0
    %326 = vmatpush1.bf16.msra.mxu0 0
    %327 = vmatprep.subr.bf16.mxu0 0
    %328 = vmatpush1.bf16.msra.mxu0 0
    %329 = vmatprep.subr.bf16.mxu0 0
    %330 = vmatpush1.bf16.msra.mxu0 0
    %331 = vmatprep.subr.bf16.mxu0 0
    %332 = vmatpush1.bf16.msra.mxu0 0
    %333 = vmatprep.subr.bf16.mxu0 0
    %334 = vmatpush1.bf16.msra.mxu0 0
    %335 = vmatprep.subr.bf16.mxu0 0
    %336 = vmatpush1.bf16.msra.mxu0 0
    %337 = vmatprep.subr.bf16.mxu0 0
    %338 = vmatpush1.bf16.msra.mxu0 0
    %339 = vmatprep.subr.bf16.mxu0 0
    %340 = vmatpush1.bf16.msra.mxu0 0
    %341 = vmatprep.subr.bf16.mxu0 0
    %342 = vmatpush1.bf16.msra.mxu0 0
    %343 = vmatprep.mubr.bf16.mxu0 0
    %344 = vmatmul.mubr.bf16.gmra.mrb[0].mxu0 %v309
    %v345 = vpop.f32.mrb[0].mxu0
    %v346 = vadd.f32 %v192, %v345
    %v347 = vpop.f32.mrb[0].mxu0
    %v348 = vpop.f32.mrb[0].mxu0
    %v349 = vpop.f32.mrb[0].mxu0
    %350 = vdwg.mxu0
    %v351 = vxor.u32 %v346, 2147483648
    %v352 = vmul.f32 %v351, 1.442695
    %v353 = vpow.pop %v352
    %v354 = vadd.f32 %v353, 1.0
    %v355 = vrcp.pop %v354
    %v356 = vmul.f32 1.0, %v355
    %v357 = vtanh.pop %v346
    %v358 = vmul.f32 %v356, 0.0
    %360 = vrot.lane.b32.xlu0 %v357, 64
    %v361 = vpop.permute.xlu0 %360
    %v363 = vmul.f32 %v356, %v361
    %365 = vrot.lane.b32.xlu0 %v363, 32
    %v366 = vpop.permute.xlu0 %365
    %v368 = vadd.f32 %v358, %v366
    %v369 = vtanh.pop %v368
    %371 = vrot.lane.b32.xlu0 %v369, 64
    %v372 = vpop.permute.xlu0 %371
    %v374 = vmul.f32 %v356, %v372
    %v375 = vtanh.pop %v374
    %377 = vrot.lane.b32.xlu0 %v375, 32
    %v378 = vpop.permute.xlu0 %377
    %380 = vst.msk [vmem:[#allocation3] sm:$0xff] %vm207, %v378
    %s381 = scalar_lea.vmem [#allocation2], 8
    %v382 = vld [vmem:[%s381] sm:$0xff]
    %v383 = vpack.c.bf16 %v275, %v275
    %385 = vrot.lane.b32.xlu0 %v383, 32
    %v386 = vpop.permute.xlu0 %385
    %v388 = vsel %vm207, %v386, 0
    %390 = vmatprep.subr.bf16.mxu0 0
    %391 = vmatpush1.bf16.msra.mxu0 %v203
    %392 = vmatprep.subr.bf16.mxu0 0
    %393 = vmatpush1.bf16.msra.mxu0 %v204
    %394 = vmatprep.subr.bf16.mxu0 0
    %395 = vmatpush1.bf16.msra.mxu0 0
    %396 = vmatprep.subr.bf16.mxu0 0
    %397 = vmatpush1.bf16.msra.mxu0 0
    %398 = vmatprep.subr.bf16.mxu0 0
    %399 = vmatpush1.bf16.msra.mxu0 0
    %400 = vmatprep.subr.bf16.mxu0 0
    %401 = vmatpush1.bf16.msra.mxu0 0
    %402 = vmatprep.subr.bf16.mxu0 0
    %403 = vmatpush1.bf16.msra.mxu0 0
    %404 = vmatprep.subr.bf16.mxu0 0
    %405 = vmatpush1.bf16.msra.mxu0 0
    %406 = vmatprep.subr.bf16.mxu0 0
    %407 = vmatpush1.bf16.msra.mxu0 0
    %408 = vmatprep.subr.bf16.mxu0 0
    %409 = vmatpush1.bf16.msra.mxu0 0
    %410 = vmatprep.subr.bf16.mxu0 0
    %411 = vmatpush1.bf16.msra.mxu0 0
    %412 = vmatprep.subr.bf16.mxu0 0
    %413 = vmatpush1.bf16.msra.mxu0 0
    %414 = vmatprep.subr.bf16.mxu0 0
    %415 = vmatpush1.bf16.msra.mxu0 0
    %416 = vmatprep.subr.bf16.mxu0 0
    %417 = vmatpush1.bf16.msra.mxu0 0
    %418 = vmatprep.subr.bf16.mxu0 0
    %419 = vmatpush1.bf16.msra.mxu0 0
    %420 = vmatprep.subr.bf16.mxu0 0
    %421 = vmatpush1.bf16.msra.mxu0 0
    %422 = vmatprep.mubr.bf16.mxu0 0
    %423 = vmatmul.mubr.bf16.gmra.mrb[0].mxu0 %v388
    %v424 = vpop.f32.mrb[0].mxu0
    %v425 = vadd.f32 0.0, %v424
    %v426 = vpop.f32.mrb[0].mxu0
    %v427 = vpop.f32.mrb[0].mxu0
    %v428 = vpop.f32.mrb[0].mxu0
    %429 = vdwg.mxu0
    %v430 = vadd.f32 %v382, %v425
    %v431 = vxor.u32 %v430, 2147483648
    %v432 = vmul.f32 %v431, 1.442695
    %v433 = vpow.pop %v432
    %v434 = vadd.f32 %v433, 1.0
    %v435 = vrcp.pop %v434
    %v436 = vmul.f32 1.0, %v435
    %v437 = vtanh.pop %v430
    %v438 = vmul.f32 %v436, %v269
    %440 = vrot.lane.b32.xlu0 %v437, 64
    %v441 = vpop.permute.xlu0 %440
    %v443 = vmul.f32 %v436, %v441
    %445 = vrot.lane.b32.xlu0 %v443, 32
    %v446 = vpop.permute.xlu0 %445
    %v448 = vadd.f32 %v438, %v446
    %v449 = vtanh.pop %v448
    %451 = vrot.lane.b32.xlu0 %v449, 64
    %v452 = vpop.permute.xlu0 %451
    %v454 = vmul.f32 %v436, %v452
    %v455 = vtanh.pop %v454
    %457 = vrot.lane.b32.xlu0 %v455, 32
    %v458 = vpop.permute.xlu0 %457
    %461 = vrot.lane.b32.xlu0 %v374, 64
    %v462 = vpop.permute.xlu0 %461
    %v464 = vsel %vm207, %v458, %v462
    %v465 = vpack.c.bf16 %v464, %v464
    %v467 = vsel %vm307, %v465, 0
    %469 = vmatprep.subr.bf16.mxu0 0
    %470 = vmatpush1.bf16.msra.mxu0 %v299
    %471 = vmatprep.subr.bf16.mxu0 0
    %472 = vmatpush1.bf16.msra.mxu0 %v300
    %473 = vmatprep.subr.bf16.mxu0 0
    %474 = vmatpush1.bf16.msra.mxu0 %v301
    %475 = vmatprep.subr.bf16.mxu0 0
    %476 = vmatpush1.bf16.msra.mxu0 %v302
    %477 = vmatprep.subr.bf16.mxu0 0
    %478 = vmatpush1.bf16.msra.mxu0 0
    %479 = vmatprep.subr.bf16.mxu0 0
    %480 = vmatpush1.bf16.msra.mxu0 0
    %481 = vmatprep.subr.bf16.mxu0 0
    %482 = vmatpush1.bf16.msra.mxu0 0
    %483 = vmatprep.subr.bf16.mxu0 0
    %484 = vmatpush1.bf16.msra.mxu0 0
    %485 = vmatprep.subr.bf16.mxu0 0
    %486 = vmatpush1.bf16.msra.mxu0 0
    %487 = vmatprep.subr.bf16.mxu0 0
    %488 = vmatpush1.bf16.msra.mxu0 0
    %489 = vmatprep.subr.bf16.mxu0 0
    %490 = vmatpush1.bf16.msra.mxu0 0
    %491 = vmatprep.subr.bf16.mxu0 0
    %492 = vmatpush1.bf16.msra.mxu0 0
    %493 = vmatprep.subr.bf16.mxu0 0
    %494 = vmatpush1.bf16.msra.mxu0 0
    %495 = vmatprep.subr.bf16.mxu0 0
    %496 = vmatpush1.bf16.msra.mxu0 0
    %497 = vmatprep.subr.bf16.mxu0 0
    %498 = vmatpush1.bf16.msra.mxu0 0
    %499 = vmatprep.subr.bf16.mxu0 0
    %500 = vmatpush1.bf16.msra.mxu0 0
    %501 = vmatprep.mubr.bf16.mxu0 0
    %502 = vmatmul.mubr.bf16.gmra.mrb[0].mxu0 %v467
    %v503 = vpop.f32.mrb[0].mxu0
    %v504 = vadd.f32 %v192, %v503
    %v505 = vpop.f32.mrb[0].mxu0
    %v506 = vpop.f32.mrb[0].mxu0
    %v507 = vpop.f32.mrb[0].mxu0
    %508 = vdwg.mxu0
    %v509 = vxor.u32 %v504, 2147483648
    %v510 = vmul.f32 %v509, 1.442695
    %v511 = vpow.pop %v510
    %v512 = vadd.f32 %v511, 1.0
    %v513 = vrcp.pop %v512
    %v514 = vmul.f32 1.0, %v513
    %v515 = vtanh.pop %v504
    %v516 = vmul.f32 %v514, %v368
    %518 = vrot.lane.b32.xlu0 %v515, 64
    %v519 = vpop.permute.xlu0 %518
    %v521 = vmul.f32 %v514, %v519
    %523 = vrot.lane.b32.xlu0 %v521, 32
    %v524 = vpop.permute.xlu0 %523
    %v526 = vadd.f32 %v516, %v524
    %v527 = vtanh.pop %v526
    %529 = vrot.lane.b32.xlu0 %v527, 64
    %v530 = vpop.permute.xlu0 %529
    %v532 = vmul.f32 %v514, %v530
    %v533 = vtanh.pop %v532
    %535 = vrot.lane.b32.xlu0 %v533, 32
    %v536 = vpop.permute.xlu0 %535
    %s538 = scalar_lea.vmem [#allocation3], 8
    %539 = vst.msk [vmem:[%s538] sm:$0xff] %vm207, %v536
    %s540 = scalar_lea.vmem [#allocation2], 16
    %v541 = vld [vmem:[%s540] sm:$0xff]
    %v542 = vpack.c.bf16 %v454, %v454
    %544 = vrot.lane.b32.xlu0 %v542, 32
    %v545 = vpop.permute.xlu0 %544
    %v547 = vsel %vm207, %v545, 0
    %549 = vmatprep.subr.bf16.mxu0 0
    %550 = vmatpush1.bf16.msra.mxu0 %v203
    %551 = vmatprep.subr.bf16.mxu0 0
    %552 = vmatpush1.bf16.msra.mxu0 %v204
    %553 = vmatprep.subr.bf16.mxu0 0
    %554 = vmatpush1.bf16.msra.mxu0 0
    %555 = vmatprep.subr.bf16.mxu0 0
    %556 = vmatpush1.bf16.msra.mxu0 0
    %557 = vmatprep.subr.bf16.mxu0 0
    %558 = vmatpush1.bf16.msra.mxu0 0
    %559 = vmatprep.subr.bf16.mxu0 0
    %560 = vmatpush1.bf16.msra.mxu0 0
    %561 = vmatprep.subr.bf16.mxu0 0
    %562 = vmatpush1.bf16.msra.mxu0 0
    %563 = vmatprep.subr.bf16.mxu0 0
    %564 = vmatpush1.bf16.msra.mxu0 0
    %565 = vmatprep.subr.bf16.mxu0 0
    %566 = vmatpush1.bf16.msra.mxu0 0
    %567 = vmatprep.subr.bf16.mxu0 0
    %568 = vmatpush1.bf16.msra.mxu0 0
    %569 = vmatprep.subr.bf16.mxu0 0
    %570 = vmatpush1.bf16.msra.mxu0 0
    %571 = vmatprep.subr.bf16.mxu0 0
    %572 = vmatpush1.bf16.msra.mxu0 0
    %573 = vmatprep.subr.bf16.mxu0 0
    %574 = vmatpush1.bf16.msra.mxu0 0
    %575 = vmatprep.subr.bf16.mxu0 0
    %576 = vmatpush1.bf16.msra.mxu0 0
    %577 = vmatprep.subr.bf16.mxu0 0
    %578 = vmatpush1.bf16.msra.mxu0 0
    %579 = vmatprep.subr.bf16.mxu0 0
    %580 = vmatpush1.bf16.msra.mxu0 0
    %581 = vmatprep.mubr.bf16.mxu0 0
    %582 = vmatmul.mubr.bf16.gmra.mrb[0].mxu0 %v547
    %v583 = vpop.f32.mrb[0].mxu0
    %v584 = vadd.f32 0.0, %v583
    %v585 = vpop.f32.mrb[0].mxu0
    %v586 = vpop.f32.mrb[0].mxu0
    %v587 = vpop.f32.mrb[0].mxu0
    %588 = vdwg.mxu0
    %v589 = vadd.f32 %v541, %v584
    %v590 = vxor.u32 %v589, 2147483648
    %v591 = vmul.f32 %v590, 1.442695
    %v592 = vpow.pop %v591
    %v593 = vadd.f32 %v592, 1.0
    %v594 = vrcp.pop %v593
    %v595 = vmul.f32 1.0, %v594
    %v596 = vtanh.pop %v589
    %v597 = vmul.f32 %v595, %v448
    %599 = vrot.lane.b32.xlu0 %v596, 64
    %v600 = vpop.permute.xlu0 %599
    %v602 = vmul.f32 %v595, %v600
    %604 = vrot.lane.b32.xlu0 %v602, 32
    %v605 = vpop.permute.xlu0 %604
    %v607 = vadd.f32 %v597, %v605
    %v608 = vtanh.pop %v607
    %610 = vrot.lane.b32.xlu0 %v608, 64
    %v611 = vpop.permute.xlu0 %610
    %v613 = vmul.f32 %v595, %v611
    %v614 = vtanh.pop %v613
    %616 = vrot.lane.b32.xlu0 %v614, 32
    %v617 = vpop.permute.xlu0 %616
    %620 = vrot.lane.b32.xlu0 %v532, 64
    %v621 = vpop.permute.xlu0 %620
    %v623 = vsel %vm207, %v617, %v621
    %v624 = vpack.c.bf16 %v623, %v623
    %v626 = vsel %vm307, %v624, 0
    %628 = vmatprep.subr.bf16.mxu0 0
    %629 = vmatpush1.bf16.msra.mxu0 %v299
    %630 = vmatprep.subr.bf16.mxu0 0
    %631 = vmatpush1.bf16.msra.mxu0 %v300
    %632 = vmatprep.subr.bf16.mxu0 0
    %633 = vmatpush1.bf16.msra.mxu0 %v301
    %634 = vmatprep.subr.bf16.mxu0 0
    %635 = vmatpush1.bf16.msra.mxu0 %v302
    %636 = vmatprep.subr.bf16.mxu0 0
    %637 = vmatpush1.bf16.msra.mxu0 0
    %638 = vmatprep.subr.bf16.mxu0 0
    %639 = vmatpush1.bf16.msra.mxu0 0
    %640 = vmatprep.subr.bf16.mxu0 0
    %641 = vmatpush1.bf16.msra.mxu0 0
    %642 = vmatprep.subr.bf16.mxu0 0
    %643 = vmatpush1.bf16.msra.mxu0 0
    %644 = vmatprep.subr.bf16.mxu0 0
    %645 = vmatpush1.bf16.msra.mxu0 0
    %646 = vmatprep.subr.bf16.mxu0 0
    %647 = vmatpush1.bf16.msra.mxu0 0
    %648 = vmatprep.subr.bf16.mxu0 0
    %649 = vmatpush1.bf16.msra.mxu0 0
    %650 = vmatprep.subr.bf16.mxu0 0
    %651 = vmatpush1.bf16.msra.mxu0 0
    %652 = vmatprep.subr.bf16.mxu0 0
    %653 = vmatpush1.bf16.msra.mxu0 0
    %654 = vmatprep.subr.bf16.mxu0 0
    %655 = vmatpush1.bf16.msra.mxu0 0
    %656 = vmatprep.subr.bf16.mxu0 0
    %657 = vmatpush1.bf16.msra.mxu0 0
    %658 = vmatprep.subr.bf16.mxu0 0
    %659 = vmatpush1.bf16.msra.mxu0 0
    %660 = vmatprep.mubr.bf16.mxu0 0
    %661 = vmatmul.mubr.bf16.gmra.mrb[0].mxu0 %v626
    %v662 = vpop.f32.mrb[0].mxu0
    %v663 = vadd.f32 %v192, %v662
    %v664 = vpop.f32.mrb[0].mxu0
    %v665 = vpop.f32.mrb[0].mxu0
    %v666 = vpop.f32.mrb[0].mxu0
    %667 = vdwg.mxu0
    %v668 = vxor.u32 %v663, 2147483648
    %v669 = vmul.f32 %v668, 1.442695
    %v670 = vpow.pop %v669
    %v671 = vadd.f32 %v670, 1.0
    %v672 = vrcp.pop %v671
    %v673 = vmul.f32 1.0, %v672
    %v674 = vtanh.pop %v663
    %v675 = vmul.f32 %v673, %v526
    %677 = vrot.lane.b32.xlu0 %v674, 64
    %v678 = vpop.permute.xlu0 %677
    %v680 = vmul.f32 %v673, %v678
    %682 = vrot.lane.b32.xlu0 %v680, 32
    %v683 = vpop.permute.xlu0 %682
    %v685 = vadd.f32 %v675, %v683
    %v686 = vtanh.pop %v685
    %688 = vrot.lane.b32.xlu0 %v686, 64
    %v689 = vpop.permute.xlu0 %688
    %v691 = vmul.f32 %v673, %v689
    %v692 = vtanh.pop %v691
    %694 = vrot.lane.b32.xlu0 %v692, 32
    %v695 = vpop.permute.xlu0 %694
    %s697 = scalar_lea.vmem [#allocation3], 16
    %698 = vst.msk [vmem:[%s697] sm:$0xff] %vm207, %v695
    %s699 = scalar_lea.vmem [#allocation2], 24
    %v700 = vld [vmem:[%s699] sm:$0xff]
    %v701 = vpack.c.bf16 %v613, %v613
    %703 = vrot.lane.b32.xlu0 %v701, 32
    %v704 = vpop.permute.xlu0 %703
    %v706 = vsel %vm207, %v704, 0
    %708 = vmatprep.subr.bf16.mxu0 0
    %709 = vmatpush1.bf16.msra.mxu0 %v203
    %710 = vmatprep.subr.bf16.mxu0 0
    %711 = vmatpush1.bf16.msra.mxu0 %v204
    %712 = vmatprep.subr.bf16.mxu0 0
    %713 = vmatpush1.bf16.msra.mxu0 0
    %714 = vmatprep.subr.bf16.mxu0 0
    %715 = vmatpush1.bf16.msra.mxu0 0
    %716 = vmatprep.subr.bf16.mxu0 0
    %717 = vmatpush1.bf16.msra.mxu0 0
    %718 = vmatprep.subr.bf16.mxu0 0
    %719 = vmatpush1.bf16.msra.mxu0 0
    %720 = vmatprep.subr.bf16.mxu0 0
    %721 = vmatpush1.bf16.msra.mxu0 0
    %722 = vmatprep.subr.bf16.mxu0 0
    %723 = vmatpush1.bf16.msra.mxu0 0
    %724 = vmatprep.subr.bf16.mxu0 0
    %725 = vmatpush1.bf16.msra.mxu0 0
    %726 = vmatprep.subr.bf16.mxu0 0
    %727 = vmatpush1.bf16.msra.mxu0 0
    %728 = vmatprep.subr.bf16.mxu0 0
    %729 = vmatpush1.bf16.msra.mxu0 0
    %730 = vmatprep.subr.bf16.mxu0 0
    %731 = vmatpush1.bf16.msra.mxu0 0
    %732 = vmatprep.subr.bf16.mxu0 0
    %733 = vmatpush1.bf16.msra.mxu0 0
    %734 = vmatprep.subr.bf16.mxu0 0
    %735 = vmatpush1.bf16.msra.mxu0 0
    %736 = vmatprep.subr.bf16.mxu0 0
    %737 = vmatpush1.bf16.msra.mxu0 0
    %738 = vmatprep.subr.bf16.mxu0 0
    %739 = vmatpush1.bf16.msra.mxu0 0
    %740 = vmatprep.mubr.bf16.mxu0 0
    %741 = vmatmul.mubr.bf16.gmra.mrb[0].mxu0 %v706
    %v742 = vpop.f32.mrb[0].mxu0
    %v743 = vadd.f32 0.0, %v742
    %v744 = vpop.f32.mrb[0].mxu0
    %v745 = vpop.f32.mrb[0].mxu0
    %v746 = vpop.f32.mrb[0].mxu0
    %747 = vdwg.mxu0
    %v748 = vadd.f32 %v700, %v743
    %v749 = vxor.u32 %v748, 2147483648
    %v750 = vmul.f32 %v749, 1.442695
    %v751 = vpow.pop %v750
    %v752 = vadd.f32 %v751, 1.0
    %v753 = vrcp.pop %v752
    %v754 = vmul.f32 1.0, %v753
    %v755 = vtanh.pop %v748
    %v756 = vmul.f32 %v754, %v607
    %758 = vrot.lane.b32.xlu0 %v755, 64
    %v759 = vpop.permute.xlu0 %758
    %v761 = vmul.f32 %v754, %v759
    %763 = vrot.lane.b32.xlu0 %v761, 32
    %v764 = vpop.permute.xlu0 %763
    %v766 = vadd.f32 %v756, %v764
    %v767 = vtanh.pop %v766
    %769 = vrot.lane.b32.xlu0 %v767, 64
    %v770 = vpop.permute.xlu0 %769
    %v772 = vmul.f32 %v754, %v770
    %v773 = vtanh.pop %v772
    %775 = vrot.lane.b32.xlu0 %v773, 32
    %v776 = vpop.permute.xlu0 %775
    %779 = vrot.lane.b32.xlu0 %v691, 64
    %v780 = vpop.permute.xlu0 %779
    %v782 = vsel %vm207, %v776, %v780
    %v783 = vpack.c.bf16 %v782, %v782
    %v785 = vsel %vm307, %v783, 0
    %787 = vmatprep.subr.bf16.mxu0 0
    %788 = vmatpush1.bf16.msra.mxu0 %v299
    %789 = vmatprep.subr.bf16.mxu0 0
    %790 = vmatpush1.bf16.msra.mxu0 %v300
    %791 = vmatprep.subr.bf16.mxu0 0
    %792 = vmatpush1.bf16.msra.mxu0 %v301
    %793 = vmatprep.subr.bf16.mxu0 0
    %794 = vmatpush1.bf16.msra.mxu0 %v302
    %795 = vmatprep.subr.bf16.mxu0 0
    %796 = vmatpush1.bf16.msra.mxu0 0
    %797 = vmatprep.subr.bf16.mxu0 0
    %798 = vmatpush1.bf16.msra.mxu0 0
    %799 = vmatprep.subr.bf16.mxu0 0
    %800 = vmatpush1.bf16.msra.mxu0 0
    %801 = vmatprep.subr.bf16.mxu0 0
    %802 = vmatpush1.bf16.msra.mxu0 0
    %803 = vmatprep.subr.bf16.mxu0 0
    %804 = vmatpush1.bf16.msra.mxu0 0
    %805 = vmatprep.subr.bf16.mxu0 0
    %806 = vmatpush1.bf16.msra.mxu0 0
    %807 = vmatprep.subr.bf16.mxu0 0
    %808 = vmatpush1.bf16.msra.mxu0 0
    %809 = vmatprep.subr.bf16.mxu0 0
    %810 = vmatpush1.bf16.msra.mxu0 0
    %811 = vmatprep.subr.bf16.mxu0 0
    %812 = vmatpush1.bf16.msra.mxu0 0
    %813 = vmatprep.subr.bf16.mxu0 0
    %814 = vmatpush1.bf16.msra.mxu0 0
    %815 = vmatprep.subr.bf16.mxu0 0
    %816 = vmatpush1.bf16.msra.mxu0 0
    %817 = vmatprep.subr.bf16.mxu0 0
    %818 = vmatpush1.bf16.msra.mxu0 0
    %819 = vmatprep.mubr.bf16.mxu0 0
    %820 = vmatmul.mubr.bf16.gmra.mrb[0].mxu0 %v785
    %v821 = vpop.f32.mrb[0].mxu0
    %v822 = vadd.f32 %v192, %v821
    %v823 = vpop.f32.mrb[0].mxu0
    %v824 = vpop.f32.mrb[0].mxu0
    %v825 = vpop.f32.mrb[0].mxu0
    %826 = vdwg.mxu0
    %v827 = vxor.u32 %v822, 2147483648
    %v828 = vmul.f32 %v827, 1.442695
    %v829 = vpow.pop %v828
    %v830 = vadd.f32 %v829, 1.0
    %v831 = vrcp.pop %v830
    %v832 = vmul.f32 1.0, %v831
    %v833 = vtanh.pop %v822
    %v834 = vmul.f32 %v832, %v685
    %836 = vrot.lane.b32.xlu0 %v833, 64
    %v837 = vpop.permute.xlu0 %836
    %v839 = vmul.f32 %v832, %v837
    %841 = vrot.lane.b32.xlu0 %v839, 32
    %v842 = vpop.permute.xlu0 %841
    %v844 = vadd.f32 %v834, %v842
    %v845 = vtanh.pop %v844
    %847 = vrot.lane.b32.xlu0 %v845, 64
    %v848 = vpop.permute.xlu0 %847
    %v850 = vmul.f32 %v832, %v848
    %v851 = vtanh.pop %v850
    %853 = vrot.lane.b32.xlu0 %v851, 32
    %v854 = vpop.permute.xlu0 %853
    %s856 = scalar_lea.vmem [#allocation3], 24
    %857 = vst.msk [vmem:[%s856] sm:$0xff] %vm207, %v854
    %s858 = scalar_lea.vmem [#allocation2], 32
    %v859 = vld [vmem:[%s858] sm:$0xff]
    %v860 = vpack.c.bf16 %v772, %v772
    %862 = vrot.lane.b32.xlu0 %v860, 32
    %v863 = vpop.permute.xlu0 %862
    %v865 = vsel %vm207, %v863, 0
    %867 = vmatprep.subr.bf16.mxu0 0
    %868 = vmatpush1.bf16.msra.mxu0 %v203
    %869 = vmatprep.subr.bf16.mxu0 0
    %870 = vmatpush1.bf16.msra.mxu0 %v204
    %871 = vmatprep.subr.bf16.mxu0 0
    %872 = vmatpush1.bf16.msra.mxu0 0
    %873 = vmatprep.subr.bf16.mxu0 0
    %874 = vmatpush1.bf16.msra.mxu0 0
    %875 = vmatprep.subr.bf16.mxu0 0
    %876 = vmatpush1.bf16.msra.mxu0 0
    %877 = vmatprep.subr.bf16.mxu0 0
    %878 = vmatpush1.bf16.msra.mxu0 0
    %879 = vmatprep.subr.bf16.mxu0 0
    %880 = vmatpush1.bf16.msra.mxu0 0
    %881 = vmatprep.subr.bf16.mxu0 0
    %882 = vmatpush1.bf16.msra.mxu0 0
    %883 = vmatprep.subr.bf16.mxu0 0
    %884 = vmatpush1.bf16.msra.mxu0 0
    %885 = vmatprep.subr.bf16.mxu0 0
    %886 = vmatpush1.bf16.msra.mxu0 0
    %887 = vmatprep.subr.bf16.mxu0 0
    %888 = vmatpush1.bf16.msra.mxu0 0
    %889 = vmatprep.subr.bf16.mxu0 0
    %890 = vmatpush1.bf16.msra.mxu0 0
    %891 = vmatprep.subr.bf16.mxu0 0
    %892 = vmatpush1.bf16.msra.mxu0 0
    %893 = vmatprep.subr.bf16.mxu0 0
    %894 = vmatpush1.bf16.msra.mxu0 0
    %895 = vmatprep.subr.bf16.mxu0 0
    %896 = vmatpush1.bf16.msra.mxu0 0
    %897 = vmatprep.subr.bf16.mxu0 0
    %898 = vmatpush1.bf16.msra.mxu0 0
    %899 = vmatprep.mubr.bf16.mxu0 0
    %900 = vmatmul.mubr.bf16.gmra.mrb[0].mxu0 %v865
    %v901 = vpop.f32.mrb[0].mxu0
    %v902 = vadd.f32 0.0, %v901
    %v903 = vpop.f32.mrb[0].mxu0
    %v904 = vpop.f32.mrb[0].mxu0
    %v905 = vpop.f32.mrb[0].mxu0
    %906 = vdwg.mxu0
    %v907 = vadd.f32 %v859, %v902
    %v908 = vxor.u32 %v907, 2147483648
    %v909 = vmul.f32 %v908, 1.442695
    %v910 = vpow.pop %v909
    %v911 = vadd.f32 %v910, 1.0
    %v912 = vrcp.pop %v911
    %v913 = vmul.f32 1.0, %v912
    %v914 = vtanh.pop %v907
    %v915 = vmul.f32 %v913, %v766
    %917 = vrot.lane.b32.xlu0 %v914, 64
    %v918 = vpop.permute.xlu0 %917
    %v920 = vmul.f32 %v913, %v918
    %922 = vrot.lane.b32.xlu0 %v920, 32
    %v923 = vpop.permute.xlu0 %922
    %v925 = vadd.f32 %v915, %v923
    %v926 = vtanh.pop %v925
    %928 = vrot.lane.b32.xlu0 %v926, 64
    %v929 = vpop.permute.xlu0 %928
    %v931 = vmul.f32 %v913, %v929
    %v932 = vtanh.pop %v931
    %934 = vrot.lane.b32.xlu0 %v932, 32
    %v935 = vpop.permute.xlu0 %934
    %938 = vrot.lane.b32.xlu0 %v850, 64
    %v939 = vpop.permute.xlu0 %938
    %v941 = vsel %vm207, %v935, %v939
    %v942 = vpack.c.bf16 %v941, %v941
    %v944 = vsel %vm307, %v942, 0
    %946 = vmatprep.subr.bf16.mxu0 0
    %947 = vmatpush1.bf16.msra.mxu0 %v299
    %948 = vmatprep.subr.bf16.mxu0 0
    %949 = vmatpush1.bf16.msra.mxu0 %v300
    %950 = vmatprep.subr.bf16.mxu0 0
    %951 = vmatpush1.bf16.msra.mxu0 %v301
    %952 = vmatprep.subr.bf16.mxu0 0
    %953 = vmatpush1.bf16.msra.mxu0 %v302
    %954 = vmatprep.subr.bf16.mxu0 0
    %955 = vmatpush1.bf16.msra.mxu0 0
    %956 = vmatprep.subr.bf16.mxu0 0
    %957 = vmatpush1.bf16.msra.mxu0 0
    %958 = vmatprep.subr.bf16.mxu0 0
    %959 = vmatpush1.bf16.msra.mxu0 0
    %960 = vmatprep.subr.bf16.mxu0 0
    %961 = vmatpush1.bf16.msra.mxu0 0
    %962 = vmatprep.subr.bf16.mxu0 0
    %963 = vmatpush1.bf16.msra.mxu0 0
    %964 = vmatprep.subr.bf16.mxu0 0
    %965 = vmatpush1.bf16.msra.mxu0 0
    %966 = vmatprep.subr.bf16.mxu0 0
    %967 = vmatpush1.bf16.msra.mxu0 0
    %968 = vmatprep.subr.bf16.mxu0 0
    %969 = vmatpush1.bf16.msra.mxu0 0
    %970 = vmatprep.subr.bf16.mxu0 0
    %971 = vmatpush1.bf16.msra.mxu0 0
    %972 = vmatprep.subr.bf16.mxu0 0
    %973 = vmatpush1.bf16.msra.mxu0 0
    %974 = vmatprep.subr.bf16.mxu0 0
    %975 = vmatpush1.bf16.msra.mxu0 0
    %976 = vmatprep.subr.bf16.mxu0 0
    %977 = vmatpush1.bf16.msra.mxu0 0
    %978 = vmatprep.mubr.bf16.mxu0 0
    %979 = vmatmul.mubr.bf16.gmra.mrb[0].mxu0 %v944
    %v980 = vpop.f32.mrb[0].mxu0
    %v981 = vadd.f32 %v192, %v980
    %v982 = vpop.f32.mrb[0].mxu0
    %v983 = vpop.f32.mrb[0].mxu0
    %v984 = vpop.f32.mrb[0].mxu0
    %985 = vdwg.mxu0
    %v986 = vxor.u32 %v981, 2147483648
    %v987 = vmul.f32 %v986, 1.442695
    %v988 = vpow.pop %v987
    %v989 = vadd.f32 %v988, 1.0
    %v990 = vrcp.pop %v989
    %v991 = vmul.f32 1.0, %v990
    %v992 = vtanh.pop %v981
    %v993 = vmul.f32 %v991, %v844
    %995 = vrot.lane.b32.xlu0 %v992, 64
    %v996 = vpop.permute.xlu0 %995
    %v998 = vmul.f32 %v991, %v996
    %1000 = vrot.lane.b32.xlu0 %v998, 32
    %v1001 = vpop.permute.xlu0 %1000
    %v1003 = vadd.f32 %v993, %v1001
    %v1004 = vtanh.pop %v1003
    %1006 = vrot.lane.b32.xlu0 %v1004, 64
    %v1007 = vpop.permute.xlu0 %1006
    %v1009 = vmul.f32 %v991, %v1007
    %v1010 = vtanh.pop %v1009
    %1012 = vrot.lane.b32.xlu0 %v1010, 32
    %v1013 = vpop.permute.xlu0 %1012
    %s1015 = scalar_lea.vmem [#allocation3], 32
    %1016 = vst.msk [vmem:[%s1015] sm:$0xff] %vm207, %v1013
    %s1017 = scalar_lea.vmem [#allocation2], 40
    %v1018 = vld [vmem:[%s1017] sm:$0xff]
    %v1019 = vpack.c.bf16 %v931, %v931
    %1021 = vrot.lane.b32.xlu0 %v1019, 32
    %v1022 = vpop.permute.xlu0 %1021
    %v1024 = vsel %vm207, %v1022, 0
    %1026 = vmatprep.subr.bf16.mxu0 0
    %1027 = vmatpush1.bf16.msra.mxu0 %v203
    %1028 = vmatprep.subr.bf16.mxu0 0
    %1029 = vmatpush1.bf16.msra.mxu0 %v204
    %1030 = vmatprep.subr.bf16.mxu0 0
    %1031 = vmatpush1.bf16.msra.mxu0 0
    %1032 = vmatprep.subr.bf16.mxu0 0
    %1033 = vmatpush1.bf16.msra.mxu0 0
    %1034 = vmatprep.subr.bf16.mxu0 0
    %1035 = vmatpush1.bf16.msra.mxu0 0
    %1036 = vmatprep.subr.bf16.mxu0 0
    %1037 = vmatpush1.bf16.msra.mxu0 0
    %1038 = vmatprep.subr.bf16.mxu0 0
    %1039 = vmatpush1.bf16.msra.mxu0 0
    %1040 = vmatprep.subr.bf16.mxu0 0
    %1041 = vmatpush1.bf16.msra.mxu0 0
    %1042 = vmatprep.subr.bf16.mxu0 0
    %1043 = vmatpush1.bf16.msra.mxu0 0
    %1044 = vmatprep.subr.bf16.mxu0 0
    %1045 = vmatpush1.bf16.msra.mxu0 0
    %1046 = vmatprep.subr.bf16.mxu0 0
    %1047 = vmatpush1.bf16.msra.mxu0 0
    %1048 = vmatprep.subr.bf16.mxu0 0
    %1049 = vmatpush1.bf16.msra.mxu0 0
    %1050 = vmatprep.subr.bf16.mxu0 0
    %1051 = vmatpush1.bf16.msra.mxu0 0
    %1052 = vmatprep.subr.bf16.mxu0 0
    %1053 = vmatpush1.bf16.msra.mxu0 0
    %1054 = vmatprep.subr.bf16.mxu0 0
    %1055 = vmatpush1.bf16.msra.mxu0 0
    %1056 = vmatprep.subr.bf16.mxu0 0
    %1057 = vmatpush1.bf16.msra.mxu0 0
    %1058 = vmatprep.mubr.bf16.mxu0 0
    %1059 = vmatmul.mubr.bf16.gmra.mrb[0].mxu0 %v1024
    %v1060 = vpop.f32.mrb[0].mxu0
    %v1061 = vadd.f32 0.0, %v1060
    %v1062 = vpop.f32.mrb[0].mxu0
    %v1063 = vpop.f32.mrb[0].mxu0
    %v1064 = vpop.f32.mrb[0].mxu0
    %1065 = vdwg.mxu0
    %v1066 = vadd.f32 %v1018, %v1061
    %v1067 = vxor.u32 %v1066, 2147483648
    %v1068 = vmul.f32 %v1067, 1.442695
    %v1069 = vpow.pop %v1068
    %v1070 = vadd.f32 %v1069, 1.0
    %v1071 = vrcp.pop %v1070
    %v1072 = vmul.f32 1.0, %v1071
    %v1073 = vtanh.pop %v1066
    %v1074 = vmul.f32 %v1072, %v925
    %1076 = vrot.lane.b32.xlu0 %v1073, 64
    %v1077 = vpop.permute.xlu0 %1076
    %v1079 = vmul.f32 %v1072, %v1077
    %1081 = vrot.lane.b32.xlu0 %v1079, 32
    %v1082 = vpop.permute.xlu0 %1081
    %v1084 = vadd.f32 %v1074, %v1082
    %v1085 = vtanh.pop %v1084
    %1087 = vrot.lane.b32.xlu0 %v1085, 64
    %v1088 = vpop.permute.xlu0 %1087
    %v1090 = vmul.f32 %v1072, %v1088
    %v1091 = vtanh.pop %v1090
    %1093 = vrot.lane.b32.xlu0 %v1091, 32
    %v1094 = vpop.permute.xlu0 %1093
    %1097 = vrot.lane.b32.xlu0 %v1009, 64
    %v1098 = vpop.permute.xlu0 %1097
    %v1100 = vsel %vm207, %v1094, %v1098
    %v1101 = vpack.c.bf16 %v1100, %v1100
    %v1103 = vsel %vm307, %v1101, 0
    %1105 = vmatprep.subr.bf16.mxu0 0
    %1106 = vmatpush1.bf16.msra.mxu0 %v299
    %1107 = vmatprep.subr.bf16.mxu0 0
    %1108 = vmatpush1.bf16.msra.mxu0 %v300
    %1109 = vmatprep.subr.bf16.mxu0 0
    %1110 = vmatpush1.bf16.msra.mxu0 %v301
    %1111 = vmatprep.subr.bf16.mxu0 0
    %1112 = vmatpush1.bf16.msra.mxu0 %v302
    %1113 = vmatprep.subr.bf16.mxu0 0
    %1114 = vmatpush1.bf16.msra.mxu0 0
    %1115 = vmatprep.subr.bf16.mxu0 0
    %1116 = vmatpush1.bf16.msra.mxu0 0
    %1117 = vmatprep.subr.bf16.mxu0 0
    %1118 = vmatpush1.bf16.msra.mxu0 0
    %1119 = vmatprep.subr.bf16.mxu0 0
    %1120 = vmatpush1.bf16.msra.mxu0 0
    %1121 = vmatprep.subr.bf16.mxu0 0
    %1122 = vmatpush1.bf16.msra.mxu0 0
    %1123 = vmatprep.subr.bf16.mxu0 0
    %1124 = vmatpush1.bf16.msra.mxu0 0
    %1125 = vmatprep.subr.bf16.mxu0 0
    %1126 = vmatpush1.bf16.msra.mxu0 0
    %1127 = vmatprep.subr.bf16.mxu0 0
    %1128 = vmatpush1.bf16.msra.mxu0 0
    %1129 = vmatprep.subr.bf16.mxu0 0
    %1130 = vmatpush1.bf16.msra.mxu0 0
    %1131 = vmatprep.subr.bf16.mxu0 0
    %1132 = vmatpush1.bf16.msra.mxu0 0
    %1133 = vmatprep.subr.bf16.mxu0 0
    %1134 = vmatpush1.bf16.msra.mxu0 0
    %1135 = vmatprep.subr.bf16.mxu0 0
    %1136 = vmatpush1.bf16.msra.mxu0 0
    %1137 = vmatprep.mubr.bf16.mxu0 0
    %1138 = vmatmul.mubr.bf16.gmra.mrb[0].mxu0 %v1103
    %v1139 = vpop.f32.mrb[0].mxu0
    %v1140 = vadd.f32 %v192, %v1139
    %v1141 = vpop.f32.mrb[0].mxu0
    %v1142 = vpop.f32.mrb[0].mxu0
    %v1143 = vpop.f32.mrb[0].mxu0
    %1144 = vdwg.mxu0
    %v1145 = vxor.u32 %v1140, 2147483648
    %v1146 = vmul.f32 %v1145, 1.442695
    %v1147 = vpow.pop %v1146
    %v1148 = vadd.f32 %v1147, 1.0
    %v1149 = vrcp.pop %v1148
    %v1150 = vmul.f32 1.0, %v1149
    %v1151 = vtanh.pop %v1140
    %v1152 = vmul.f32 %v1150, %v1003
    %1154 = vrot.lane.b32.xlu0 %v1151, 64
    %v1155 = vpop.permute.xlu0 %1154
    %v1157 = vmul.f32 %v1150, %v1155
    %1159 = vrot.lane.b32.xlu0 %v1157, 32
    %v1160 = vpop.permute.xlu0 %1159
    %v1162 = vadd.f32 %v1152, %v1160
    %v1163 = vtanh.pop %v1162
    %1165 = vrot.lane.b32.xlu0 %v1163, 64
    %v1166 = vpop.permute.xlu0 %1165
    %v1168 = vmul.f32 %v1150, %v1166
    %v1169 = vtanh.pop %v1168
    %1171 = vrot.lane.b32.xlu0 %v1169, 32
    %v1172 = vpop.permute.xlu0 %1171
    %s1174 = scalar_lea.vmem [#allocation3], 40
    %1175 = vst.msk [vmem:[%s1174] sm:$0xff] %vm207, %v1172
    %s1176 = scalar_lea.vmem [#allocation2], 48
    %v1177 = vld [vmem:[%s1176] sm:$0xff]
    %v1178 = vpack.c.bf16 %v1090, %v1090
    %1180 = vrot.lane.b32.xlu0 %v1178, 32
    %v1181 = vpop.permute.xlu0 %1180
    %v1183 = vsel %vm207, %v1181, 0
    %1185 = vmatprep.subr.bf16.mxu0 0
    %1186 = vmatpush1.bf16.msra.mxu0 %v203
    %1187 = vmatprep.subr.bf16.mxu0 0
    %1188 = vmatpush1.bf16.msra.mxu0 %v204
    %1189 = vmatprep.subr.bf16.mxu0 0
    %1190 = vmatpush1.bf16.msra.mxu0 0
    %1191 = vmatprep.subr.bf16.mxu0 0
    %1192 = vmatpush1.bf16.msra.mxu0 0
    %1193 = vmatprep.subr.bf16.mxu0 0
    %1194 = vmatpush1.bf16.msra.mxu0 0
    %1195 = vmatprep.subr.bf16.mxu0 0
    %1196 = vmatpush1.bf16.msra.mxu0 0
    %1197 = vmatprep.subr.bf16.mxu0 0
    %1198 = vmatpush1.bf16.msra.mxu0 0
    %1199 = vmatprep.subr.bf16.mxu0 0
    %1200 = vmatpush1.bf16.msra.mxu0 0
    %1201 = vmatprep.subr.bf16.mxu0 0
    %1202 = vmatpush1.bf16.msra.mxu0 0
    %1203 = vmatprep.subr.bf16.mxu0 0
    %1204 = vmatpush1.bf16.msra.mxu0 0
    %1205 = vmatprep.subr.bf16.mxu0 0
    %1206 = vmatpush1.bf16.msra.mxu0 0
    %1207 = vmatprep.subr.bf16.mxu0 0
    %1208 = vmatpush1.bf16.msra.mxu0 0
    %1209 = vmatprep.subr.bf16.mxu0 0
    %1210 = vmatpush1.bf16.msra.mxu0 0
    %1211 = vmatprep.subr.bf16.mxu0 0
    %1212 = vmatpush1.bf16.msra.mxu0 0
    %1213 = vmatprep.subr.bf16.mxu0 0
    %1214 = vmatpush1.bf16.msra.mxu0 0
    %1215 = vmatprep.subr.bf16.mxu0 0
    %1216 = vmatpush1.bf16.msra.mxu0 0
    %1217 = vmatprep.mubr.bf16.mxu0 0
    %1218 = vmatmul.mubr.bf16.gmra.mrb[0].mxu0 %v1183
    %v1219 = vpop.f32.mrb[0].mxu0
    %v1220 = vadd.f32 0.0, %v1219
    %v1221 = vpop.f32.mrb[0].mxu0
    %v1222 = vpop.f32.mrb[0].mxu0
    %v1223 = vpop.f32.mrb[0].mxu0
    %1224 = vdwg.mxu0
    %v1225 = vadd.f32 %v1177, %v1220
    %v1226 = vxor.u32 %v1225, 2147483648
    %v1227 = vmul.f32 %v1226, 1.442695
    %v1228 = vpow.pop %v1227
    %v1229 = vadd.f32 %v1228, 1.0
    %v1230 = vrcp.pop %v1229
    %v1231 = vmul.f32 1.0, %v1230
    %v1232 = vtanh.pop %v1225
    %v1233 = vmul.f32 %v1231, %v1084
    %1235 = vrot.lane.b32.xlu0 %v1232, 64
    %v1236 = vpop.permute.xlu0 %1235
    %v1238 = vmul.f32 %v1231, %v1236
    %1240 = vrot.lane.b32.xlu0 %v1238, 32
    %v1241 = vpop.permute.xlu0 %1240
    %v1243 = vadd.f32 %v1233, %v1241
    %v1244 = vtanh.pop %v1243
    %1246 = vrot.lane.b32.xlu0 %v1244, 64
    %v1247 = vpop.permute.xlu0 %1246
    %v1249 = vmul.f32 %v1231, %v1247
    %v1250 = vtanh.pop %v1249
    %1252 = vrot.lane.b32.xlu0 %v1250, 32
    %v1253 = vpop.permute.xlu0 %1252
    %1256 = vrot.lane.b32.xlu0 %v1168, 64
    %v1257 = vpop.permute.xlu0 %1256
    %v1259 = vsel %vm207, %v1253, %v1257
    %v1260 = vpack.c.bf16 %v1259, %v1259
    %v1262 = vsel %vm307, %v1260, 0
    %1264 = vmatprep.subr.bf16.mxu0 0
    %1265 = vmatpush1.bf16.msra.mxu0 %v299
    %1266 = vmatprep.subr.bf16.mxu0 0
    %1267 = vmatpush1.bf16.msra.mxu0 %v300
    %1268 = vmatprep.subr.bf16.mxu0 0
    %1269 = vmatpush1.bf16.msra.mxu0 %v301
    %1270 = vmatprep.subr.bf16.mxu0 0
    %1271 = vmatpush1.bf16.msra.mxu0 %v302
    %1272 = vmatprep.subr.bf16.mxu0 0
    %1273 = vmatpush1.bf16.msra.mxu0 0
    %1274 = vmatprep.subr.bf16.mxu0 0
    %1275 = vmatpush1.bf16.msra.mxu0 0
    %1276 = vmatprep.subr.bf16.mxu0 0
    %1277 = vmatpush1.bf16.msra.mxu0 0
    %1278 = vmatprep.subr.bf16.mxu0 0
    %1279 = vmatpush1.bf16.msra.mxu0 0
    %1280 = vmatprep.subr.bf16.mxu0 0
    %1281 = vmatpush1.bf16.msra.mxu0 0
    %1282 = vmatprep.subr.bf16.mxu0 0
    %1283 = vmatpush1.bf16.msra.mxu0 0
    %1284 = vmatprep.subr.bf16.mxu0 0
    %1285 = vmatpush1.bf16.msra.mxu0 0
    %1286 = vmatprep.subr.bf16.mxu0 0
    %1287 = vmatpush1.bf16.msra.mxu0 0
    %1288 = vmatprep.subr.bf16.mxu0 0
    %1289 = vmatpush1.bf16.msra.mxu0 0
    %1290 = vmatprep.subr.bf16.mxu0 0
    %1291 = vmatpush1.bf16.msra.mxu0 0
    %1292 = vmatprep.subr.bf16.mxu0 0
    %1293 = vmatpush1.bf16.msra.mxu0 0
    %1294 = vmatprep.subr.bf16.mxu0 0
    %1295 = vmatpush1.bf16.msra.mxu0 0
    %1296 = vmatprep.mubr.bf16.mxu0 0
    %1297 = vmatmul.mubr.bf16.gmra.mrb[0].mxu0 %v1262
    %v1298 = vpop.f32.mrb[0].mxu0
    %v1299 = vadd.f32 %v192, %v1298
    %v1300 = vpop.f32.mrb[0].mxu0
    %v1301 = vpop.f32.mrb[0].mxu0
    %v1302 = vpop.f32.mrb[0].mxu0
    %1303 = vdwg.mxu0
    %v1304 = vxor.u32 %v1299, 2147483648
    %v1305 = vmul.f32 %v1304, 1.442695
    %v1306 = vpow.pop %v1305
    %v1307 = vadd.f32 %v1306, 1.0
    %v1308 = vrcp.pop %v1307
    %v1309 = vmul.f32 1.0, %v1308
    %v1310 = vtanh.pop %v1299
    %v1311 = vmul.f32 %v1309, %v1162
    %1313 = vrot.lane.b32.xlu0 %v1310, 64
    %v1314 = vpop.permute.xlu0 %1313
    %v1316 = vmul.f32 %v1309, %v1314
    %1318 = vrot.lane.b32.xlu0 %v1316, 32
    %v1319 = vpop.permute.xlu0 %1318
    %v1321 = vadd.f32 %v1311, %v1319
    %v1322 = vtanh.pop %v1321
    %1324 = vrot.lane.b32.xlu0 %v1322, 64
    %v1325 = vpop.permute.xlu0 %1324
    %v1327 = vmul.f32 %v1309, %v1325
    %v1328 = vtanh.pop %v1327
    %1330 = vrot.lane.b32.xlu0 %v1328, 32
    %v1331 = vpop.permute.xlu0 %1330
    %s1333 = scalar_lea.vmem [#allocation3], 48
    %1334 = vst.msk [vmem:[%s1333] sm:$0xff] %vm207, %v1331
    %s1335 = scalar_lea.vmem [#allocation2], 56
    %v1336 = vld [vmem:[%s1335] sm:$0xff]
    %v1337 = vpack.c.bf16 %v1249, %v1249
    %1339 = vrot.lane.b32.xlu0 %v1337, 32
    %v1340 = vpop.permute.xlu0 %1339
    %v1342 = vsel %vm207, %v1340, 0
    %1344 = vmatprep.subr.bf16.mxu0 0
    %1345 = vmatpush1.bf16.msra.mxu0 %v203
    %1346 = vmatprep.subr.bf16.mxu0 0
    %1347 = vmatpush1.bf16.msra.mxu0 %v204
    %1348 = vmatprep.subr.bf16.mxu0 0
    %1349 = vmatpush1.bf16.msra.mxu0 0
    %1350 = vmatprep.subr.bf16.mxu0 0
    %1351 = vmatpush1.bf16.msra.mxu0 0
    %1352 = vmatprep.subr.bf16.mxu0 0
    %1353 = vmatpush1.bf16.msra.mxu0 0
    %1354 = vmatprep.subr.bf16.mxu0 0
    %1355 = vmatpush1.bf16.msra.mxu0 0
    %1356 = vmatprep.subr.bf16.mxu0 0
    %1357 = vmatpush1.bf16.msra.mxu0 0
    %1358 = vmatprep.subr.bf16.mxu0 0
    %1359 = vmatpush1.bf16.msra.mxu0 0
    %1360 = vmatprep.subr.bf16.mxu0 0
    %1361 = vmatpush1.bf16.msra.mxu0 0
    %1362 = vmatprep.subr.bf16.mxu0 0
    %1363 = vmatpush1.bf16.msra.mxu0 0
    %1364 = vmatprep.subr.bf16.mxu0 0
    %1365 = vmatpush1.bf16.msra.mxu0 0
    %1366 = vmatprep.subr.bf16.mxu0 0
    %1367 = vmatpush1.bf16.msra.mxu0 0
    %1368 = vmatprep.subr.bf16.mxu0 0
    %1369 = vmatpush1.bf16.msra.mxu0 0
    %1370 = vmatprep.subr.bf16.mxu0 0
    %1371 = vmatpush1.bf16.msra.mxu0 0
    %1372 = vmatprep.subr.bf16.mxu0 0
    %1373 = vmatpush1.bf16.msra.mxu0 0
    %1374 = vmatprep.subr.bf16.mxu0 0
    %1375 = vmatpush1.bf16.msra.mxu0 0
    %1376 = vmatprep.mubr.bf16.mxu0 0
    %1377 = vmatmul.mubr.bf16.gmra.mrb[0].mxu0 %v1342
    %v1378 = vpop.f32.mrb[0].mxu0
    %v1379 = vadd.f32 0.0, %v1378
    %v1380 = vpop.f32.mrb[0].mxu0
    %v1381 = vpop.f32.mrb[0].mxu0
    %v1382 = vpop.f32.mrb[0].mxu0
    %1383 = vdwg.mxu0
    %v1384 = vadd.f32 %v1336, %v1379
    %v1385 = vxor.u32 %v1384, 2147483648
    %v1386 = vmul.f32 %v1385, 1.442695
    %v1387 = vpow.pop %v1386
    %v1388 = vadd.f32 %v1387, 1.0
    %v1389 = vrcp.pop %v1388
    %v1390 = vmul.f32 1.0, %v1389
    %v1391 = vtanh.pop %v1384
    %v1392 = vmul.f32 %v1390, %v1243
    %1394 = vrot.lane.b32.xlu0 %v1391, 64
    %v1395 = vpop.permute.xlu0 %1394
    %v1397 = vmul.f32 %v1390, %v1395
    %1399 = vrot.lane.b32.xlu0 %v1397, 32
    %v1400 = vpop.permute.xlu0 %1399
    %v1402 = vadd.f32 %v1392, %v1400
    %v1403 = vtanh.pop %v1402
    %1405 = vrot.lane.b32.xlu0 %v1403, 64
    %v1406 = vpop.permute.xlu0 %1405
    %v1408 = vmul.f32 %v1390, %v1406
    %v1409 = vtanh.pop %v1408
    %1411 = vrot.lane.b32.xlu0 %v1409, 32
    %v1412 = vpop.permute.xlu0 %1411
    %1415 = vrot.lane.b32.xlu0 %v1327, 64
    %v1416 = vpop.permute.xlu0 %1415
    %v1418 = vsel %vm207, %v1412, %v1416
    %v1419 = vpack.c.bf16 %v1418, %v1418
    %v1421 = vsel %vm307, %v1419, 0
    %1423 = vmatprep.subr.bf16.mxu0 0
    %1424 = vmatpush1.bf16.msra.mxu0 %v299
    %1425 = vmatprep.subr.bf16.mxu0 0
    %1426 = vmatpush1.bf16.msra.mxu0 %v300
    %1427 = vmatprep.subr.bf16.mxu0 0
    %1428 = vmatpush1.bf16.msra.mxu0 %v301
    %1429 = vmatprep.subr.bf16.mxu0 0
    %1430 = vmatpush1.bf16.msra.mxu0 %v302
    %1431 = vmatprep.subr.bf16.mxu0 0
    %1432 = vmatpush1.bf16.msra.mxu0 0
    %1433 = vmatprep.subr.bf16.mxu0 0
    %1434 = vmatpush1.bf16.msra.mxu0 0
    %1435 = vmatprep.subr.bf16.mxu0 0
    %1436 = vmatpush1.bf16.msra.mxu0 0
    %1437 = vmatprep.subr.bf16.mxu0 0
    %1438 = vmatpush1.bf16.msra.mxu0 0
    %1439 = vmatprep.subr.bf16.mxu0 0
    %1440 = vmatpush1.bf16.msra.mxu0 0
    %1441 = vmatprep.subr.bf16.mxu0 0
    %1442 = vmatpush1.bf16.msra.mxu0 0
    %1443 = vmatprep.subr.bf16.mxu0 0
    %1444 = vmatpush1.bf16.msra.mxu0 0
    %1445 = vmatprep.subr.bf16.mxu0 0
    %1446 = vmatpush1.bf16.msra.mxu0 0
    %1447 = vmatprep.subr.bf16.mxu0 0
    %1448 = vmatpush1.bf16.msra.mxu0 0
    %1449 = vmatprep.subr.bf16.mxu0 0
    %1450 = vmatpush1.bf16.msra.mxu0 0
    %1451 = vmatprep.subr.bf16.mxu0 0
    %1452 = vmatpush1.bf16.msra.mxu0 0
    %1453 = vmatprep.subr.bf16.mxu0 0
    %1454 = vmatpush1.bf16.msra.mxu0 0
    %1455 = vmatprep.mubr.bf16.mxu0 0
    %1456 = vmatmul.mubr.bf16.gmra.mrb[0].mxu0 %v1421
    %v1457 = vpop.f32.mrb[0].mxu0
    %v1458 = vadd.f32 %v192, %v1457
    %v1459 = vpop.f32.mrb[0].mxu0
    %v1460 = vpop.f32.mrb[0].mxu0
    %v1461 = vpop.f32.mrb[0].mxu0
    %1462 = vdwg.mxu0
    %v1463 = vxor.u32 %v1458, 2147483648
    %v1464 = vmul.f32 %v1463, 1.442695
    %v1465 = vpow.pop %v1464
    %v1466 = vadd.f32 %v1465, 1.0
    %v1467 = vrcp.pop %v1466
    %v1468 = vmul.f32 1.0, %v1467
    %v1469 = vtanh.pop %v1458
    %v1470 = vmul.f32 %v1468, %v1321
    %1472 = vrot.lane.b32.xlu0 %v1469, 64
    %v1473 = vpop.permute.xlu0 %1472
    %v1475 = vmul.f32 %v1468, %v1473
    %1477 = vrot.lane.b32.xlu0 %v1475, 32
    %v1478 = vpop.permute.xlu0 %1477
    %v1480 = vadd.f32 %v1470, %v1478
    %v1481 = vtanh.pop %v1480
    %1483 = vrot.lane.b32.xlu0 %v1481, 64
    %v1484 = vpop.permute.xlu0 %1483
    %v1486 = vmul.f32 %v1468, %v1484
    %v1487 = vtanh.pop %v1486
    %1489 = vrot.lane.b32.xlu0 %v1487, 32
    %v1490 = vpop.permute.xlu0 %1489
    %s1492 = scalar_lea.vmem [#allocation3], 56
    %1493 = vst.msk [vmem:[%s1492] sm:$0xff] %vm207, %v1490
    %v1494 = vld [vmem:[#allocation3] sm:$0xff]
    %v1495 = vld [vmem:[#allocation3 + $0x8] sm:$0xff]
    %v1496 = vld [vmem:[#allocation3 + $0x10] sm:$0xff]
    %v1497 = vld [vmem:[#allocation3 + $0x18] sm:$0xff]
    %v1498 = vld [vmem:[#allocation3 + $0x20] sm:$0xff]
    %v1499 = vld [vmem:[#allocation3 + $0x28] sm:$0xff]
    %v1500 = vld [vmem:[#allocation3 + $0x30] sm:$0xff]
    %v1501 = vld [vmem:[#allocation3 + $0x38] sm:$0xff]
    %v1502 = vld [vmem:[%s6] sm:$0xff]
    %v1503 = vld [vmem:[%s6 + $0x8] sm:$0xff]
    %v1504 = vld [vmem:[%s6 + $0x10] sm:$0xff]
    %v1505 = vld [vmem:[%s6 + $0x18] sm:$0xff]
    %v1507 = vsel %vm207, %v1494, 0
    %v1510 = vsel %vm207, %v1495, 0
    %v1513 = vsel %vm207, %v1496, 0
    %v1516 = vsel %vm207, %v1497, 0
    %v1519 = vsel %vm207, %v1498, 0
    %v1522 = vsel %vm207, %v1499, 0
    %v1525 = vsel %vm207, %v1500, 0
    %v1528 = vsel %vm207, %v1501, 0
    %1530 = vmatprep.subr.mxu0 0.0
    %1531 = vmatpush1.msra.mxu0 %v1502
    %1532 = vmatprep.subr.mxu0 0.0
    %1533 = vmatpush1.msra.mxu0 %v1503
    %1534 = vmatprep.subr.mxu0 0.0
    %1535 = vmatpush1.msra.mxu0 %v1504
    %1536 = vmatprep.subr.mxu0 0.0
    %1537 = vmatpush1.msra.mxu0 %v1505
    %1538 = vmatprep.subr.mxu0 0.0
    %1539 = vmatpush1.msra.mxu0 0.0
    %1540 = vmatprep.subr.mxu0 0.0
    %1541 = vmatpush1.msra.mxu0 0.0
    %1542 = vmatprep.subr.mxu0 0.0
    %1543 = vmatpush1.msra.mxu0 0.0
    %1544 = vmatprep.subr.mxu0 0.0
    %1545 = vmatpush1.msra.mxu0 0.0
    %1546 = vmatprep.subr.mxu0 0.0
    %1547 = vmatpush1.msra.mxu0 0.0
    %1548 = vmatprep.subr.mxu0 0.0
    %1549 = vmatpush1.msra.mxu0 0.0
    %1550 = vmatprep.subr.mxu0 0.0
    %1551 = vmatpush1.msra.mxu0 0.0
    %1552 = vmatprep.subr.mxu0 0.0
    %1553 = vmatpush1.msra.mxu0 0.0
    %1554 = vmatprep.subr.mxu0 0.0
    %1555 = vmatpush1.msra.mxu0 0.0
    %1556 = vmatprep.subr.mxu0 0.0
    %1557 = vmatpush1.msra.mxu0 0.0
    %1558 = vmatprep.subr.mxu0 0.0
    %1559 = vmatpush1.msra.mxu0 0.0
    %1560 = vmatprep.subr.mxu0 0.0
    %1561 = vmatpush1.msra.mxu0 0.0
    %1562 = vmatprep.subr.mxu0 0.0
    %1563 = vmatpush1.msra.mxu0 0.0
    %1564 = vmatprep.subr.mxu0 0.0
    %1565 = vmatpush1.msra.mxu0 0.0
    %1566 = vmatprep.subr.mxu0 0.0
    %1567 = vmatpush1.msra.mxu0 0.0
    %1568 = vmatprep.subr.mxu0 0.0
    %1569 = vmatpush1.msra.mxu0 0.0
    %1570 = vmatprep.subr.mxu0 0.0
    %1571 = vmatpush1.msra.mxu0 0.0
    %1572 = vmatprep.subr.mxu0 0.0
    %1573 = vmatpush1.msra.mxu0 0.0
    %1574 = vmatprep.subr.mxu0 0.0
    %1575 = vmatpush1.msra.mxu0 0.0
    %1576 = vmatprep.subr.mxu0 0.0
    %1577 = vmatpush1.msra.mxu0 0.0
    %1578 = vmatprep.subr.mxu0 0.0
    %1579 = vmatpush1.msra.mxu0 0.0
    %1580 = vmatprep.subr.mxu0 0.0
    %1581 = vmatpush1.msra.mxu0 0.0
    %1582 = vmatprep.subr.mxu0 0.0
    %1583 = vmatpush1.msra.mxu0 0.0
    %1584 = vmatprep.subr.mxu0 0.0
    %1585 = vmatpush1.msra.mxu0 0.0
    %1586 = vmatprep.subr.mxu0 0.0
    %1587 = vmatpush1.msra.mxu0 0.0
    %1588 = vmatprep.subr.mxu0 0.0
    %1589 = vmatpush1.msra.mxu0 0.0
    %1590 = vmatprep.subr.mxu0 0.0
    %1591 = vmatpush1.msra.mxu0 0.0
    %1592 = vmatprep.subr.mxu0 0.0
    %1593 = vmatpush1.msra.mxu0 0.0
    %1594 = vmatprep.mubr.f32.mxu0 0.0
    %1595 = vmatmul.mubr.f32.gmra.mrb[0].mxu0 %v1507
    %v1596 = vpop.f32.mrb[0].mxu0
    %v1597 = vadd.f32 0.0, %v1596
    %v1598 = vpop.f32.mrb[0].mxu0
    %1599 = vmatprep.mubr.f32.mxu0 0.0
    %1600 = vmatmul.mubr.f32.gmra.mrb[0].mxu0 %v1510
    %v1601 = vpop.f32.mrb[0].mxu0
    %v1602 = vadd.f32 0.0, %v1601
    %v1603 = vpop.f32.mrb[0].mxu0
    %1604 = vmatprep.mubr.f32.mxu0 0.0
    %1605 = vmatmul.mubr.f32.gmra.mrb[0].mxu0 %v1513
    %v1606 = vpop.f32.mrb[0].mxu0
    %v1607 = vadd.f32 0.0, %v1606
    %v1608 = vpop.f32.mrb[0].mxu0
    %1609 = vmatprep.mubr.f32.mxu0 0.0
    %1610 = vmatmul.mubr.f32.gmra.mrb[0].mxu0 %v1516
    %v1611 = vpop.f32.mrb[0].mxu0
    %v1612 = vadd.f32 0.0, %v1611
    %v1613 = vpop.f32.mrb[0].mxu0
    %1614 = vmatprep.mubr.f32.mxu0 0.0
    %1615 = vmatmul.mubr.f32.gmra.mrb[0].mxu0 %v1519
    %v1616 = vpop.f32.mrb[0].mxu0
    %v1617 = vadd.f32 0.0, %v1616
    %v1618 = vpop.f32.mrb[0].mxu0
    %1619 = vmatprep.mubr.f32.mxu0 0.0
    %1620 = vmatmul.mubr.f32.gmra.mrb[0].mxu0 %v1522
    %v1621 = vpop.f32.mrb[0].mxu0
    %v1622 = vadd.f32 0.0, %v1621
    %v1623 = vpop.f32.mrb[0].mxu0
    %1624 = vmatprep.mubr.f32.mxu0 0.0
    %1625 = vmatmul.mubr.f32.gmra.mrb[0].mxu0 %v1525
    %v1626 = vpop.f32.mrb[0].mxu0
    %v1627 = vadd.f32 0.0, %v1626
    %v1628 = vpop.f32.mrb[0].mxu0
    %1629 = vmatprep.mubr.f32.mxu0 0.0
    %1630 = vmatmul.mubr.f32.gmra.mrb[0].mxu0 %v1528
    %v1631 = vpop.f32.mrb[0].mxu0
    %v1632 = vadd.f32 0.0, %v1631
    %v1633 = vpop.f32.mrb[0].mxu0
    %1634 = vdwg.mxu0
    %v1635 = vld [vmem:[#allocation4] sm:$0x1]
    %v1637 = vlaneseq
    %v1638 = vshrl.u32 %v1637, 7
    %v1639 = vsub.s32 0, %v1638
    %v1640 = vrot.slane %v1635, %v1639
    %v1642 = vadd.f32 %v1597, %v1640
    %v1643 = vadd.f32 %v1602, %v1640
    %v1644 = vadd.f32 %v1607, %v1640
    %v1645 = vadd.f32 %v1612, %v1640
    %v1646 = vadd.f32 %v1617, %v1640
    %v1647 = vadd.f32 %v1622, %v1640
    %v1648 = vadd.f32 %v1627, %v1640
    %v1649 = vadd.f32 %v1632, %v1640
    %v1650 = vxor.u32 %v1642, 2147483648
    %v1651 = vxor.u32 %v1643, 2147483648
    %v1652 = vxor.u32 %v1644, 2147483648
    %v1653 = vxor.u32 %v1645, 2147483648
    %v1654 = vxor.u32 %v1646, 2147483648
    %v1655 = vxor.u32 %v1647, 2147483648
    %v1656 = vxor.u32 %v1648, 2147483648
    %v1657 = vxor.u32 %v1649, 2147483648
    %v1658 = vmul.f32 %v1650, 1.442695
    %v1659 = vpow.pop %v1658
    %v1660 = vmul.f32 %v1651, 1.442695
    %v1661 = vpow.pop %v1660
    %v1662 = vmul.f32 %v1652, 1.442695
    %v1663 = vpow.pop %v1662
    %v1664 = vmul.f32 %v1653, 1.442695
    %v1665 = vpow.pop %v1664
    %v1666 = vmul.f32 %v1654, 1.442695
    %v1667 = vpow.pop %v1666
    %v1668 = vmul.f32 %v1655, 1.442695
    %v1669 = vpow.pop %v1668
    %v1670 = vmul.f32 %v1656, 1.442695
    %v1671 = vpow.pop %v1670
    %v1672 = vmul.f32 %v1657, 1.442695
    %v1673 = vpow.pop %v1672
    %v1674 = vadd.f32 %v1659, 1.0
    %v1675 = vadd.f32 %v1661, 1.0
    %v1676 = vadd.f32 %v1663, 1.0
    %v1677 = vadd.f32 %v1665, 1.0
    %v1678 = vadd.f32 %v1667, 1.0
    %v1679 = vadd.f32 %v1669, 1.0
    %v1680 = vadd.f32 %v1671, 1.0
    %v1681 = vadd.f32 %v1673, 1.0
    %v1682 = vrcp.pop %v1674
    %v1683 = vmul.f32 1.0, %v1682
    %v1684 = vrcp.pop %v1675
    %v1685 = vmul.f32 1.0, %v1684
    %v1686 = vrcp.pop %v1676
    %v1687 = vmul.f32 1.0, %v1686
    %v1688 = vrcp.pop %v1677
    %v1689 = vmul.f32 1.0, %v1688
    %v1690 = vrcp.pop %v1678
    %v1691 = vmul.f32 1.0, %v1690
    %v1692 = vrcp.pop %v1679
    %v1693 = vmul.f32 1.0, %v1692
    %v1694 = vrcp.pop %v1680
    %v1695 = vmul.f32 1.0, %v1694
    %v1696 = vrcp.pop %v1681
    %v1697 = vmul.f32 1.0, %v1696
    %vm1698 = vcmask 7168
    %1699 = vst.msk [vmem:[%s8] sm:$0xff] %vm1698, %v1683
    %1700 = vst.msk [vmem:[%s8 + $0x8] sm:$0xff] %vm1698, %v1685
    %1701 = vst.msk [vmem:[%s8 + $0x10] sm:$0xff] %vm1698, %v1687
    %1702 = vst.msk [vmem:[%s8 + $0x18] sm:$0xff] %vm1698, %v1689
    %1703 = vst.msk [vmem:[%s8 + $0x20] sm:$0xff] %vm1698, %v1691
    %1704 = vst.msk [vmem:[%s8 + $0x28] sm:$0xff] %vm1698, %v1693
    %1705 = vst.msk [vmem:[%s8 + $0x30] sm:$0xff] %vm1698, %v1695
    %1706 = vst.msk [vmem:[%s8 + $0x38] sm:$0xff] %vm1698, %v1697
    // Predicated region
    $region38: #{lstm_net_forward.1} parent=1 // pred_check
      _
    $region39: #{lstm_net_forward.1} parent=1 // pred_check_branch
      %1708 = sbr.rel (0) target = $region41
    $region40: #{lstm_net_forward.1} parent=1 // pred_region
      _
    $region41: #{lstm_net_forward.1} parent=1 // pred_fallthru
      _
    // Predicated region
    $region42: #{lstm_net_forward.1} parent=1 // pred_check
      _
    $region43: #{lstm_net_forward.1} parent=1 // pred_check_branch
      %1710 = sbr.rel (0) target = $region45
    $region44: #{lstm_net_forward.1} parent=1 // pred_region
      _
    $region45: #{lstm_net_forward.1} parent=1 // pred_fallthru
      _
    %1711 = vsyncpa [#allocation6], 1

</llo_original>
